<compile_context>
chip_gen: v6e
topology: v6e:2x2x1
jax: 0.10.0
libtpu: 0.0.40
codegen_flags: <defaults>
</compile_context>

<pallas_src>
import functools

import jax
import jax.numpy as jnp
import numpy as np
from jax.experimental import pallas as pl
from jax.experimental.pallas import tpu as pltpu


def _gru_linear_kernel(x2d_ref, wih_ref, whh_ref, bgi_ref, bgh_ref,
                       wlin_ref, blin_ref,
                       x_out_ref, h_out_ref,
                       gi_scratch,
                       *, seq_len, batch):
    """Whole sequence in one kernel invocation.

    x2d_ref    : (S*B, I)   time-major input, flattened over (S, B)
    wih_ref    : (I, 3H)    W_ih^T, gates (r, z, n)
    whh_ref    : (H, 3H)    W_hh^T
    bgi_ref    : (1, 3H)    b_ih with b_hh folded in for the r/z gates
    bgh_ref    : (1, 3H)    zeros for r/z, b_hh for the n gate
    wlin_ref   : (H, O)     Linear weight^T
    blin_ref   : (1, O)     Linear bias
    x_out_ref  : (S*B, O)
    h_out_ref  : (S*B, H)
    gi_scratch : (S*B, 3H)  VMEM scratch for the hoisted input projection
    """
    B = batch
    H = whh_ref.shape[0]

    # --- Hoisted input projection for the whole chunk (one MXU matmul). ---
    gi_scratch[...] = (
        jnp.dot(x2d_ref[...], wih_ref[...], preferred_element_type=jnp.float32)
        + bgi_ref[...]
    )

    w_hh = whh_ref[...]
    b_gh = bgh_ref[...]

    # --- Serial recurrence, statically unrolled (S is small and fixed). ---
    h = jnp.zeros((B, H), jnp.float32)
    for t in range(seq_len):
        gi_t = gi_scratch[t * B:(t + 1) * B, :]                    # (B, 3H)
        gh = jnp.dot(h, w_hh, preferred_element_type=jnp.float32) + b_gh

        i_r, i_z, i_n = gi_t[:, 0:H], gi_t[:, H:2 * H], gi_t[:, 2 * H:3 * H]
        h_r, h_z, h_n = gh[:, 0:H], gh[:, H:2 * H], gh[:, 2 * H:3 * H]

        r = jax.nn.sigmoid(i_r + h_r)          # r/z biases already folded into gi
        z = jax.nn.sigmoid(i_z + h_z)
        n = jnp.tanh(i_n + r * h_n)            # h_n carries b_hh_n (required by GRU)
        h = (1.0 - z) * n + z * h

        h_out_ref[t * B:(t + 1) * B, :] = h.astype(h_out_ref.dtype)

    # --- Hoisted Linear head: one matmul over the whole hidden slab. ---
    h_all = h_out_ref[...]                                         # (S*B, H)
    x_out_ref[...] = (
        jnp.dot(h_all, wlin_ref[...], preferred_element_type=jnp.float32)
        + blin_ref[...]
    ).astype(x_out_ref.dtype)


def cognitive_net_forward(inp, params):
    """inp: (S, B, I) float32.  Returns (x, out) like the PyTorch module."""
    S, B, I = inp.shape
    H = params["w_hh"].shape[0]
    O = params["w_lin"].shape[1]

    # Fold b_hh of the r/z gates into the hoisted bias (the n gate must keep
    # its b_hh inside r * (h @ W_hh_n + b_hh_n)).
    b_ih = params["b_ih"]                                  # (1, 3H)
    b_hh = params["b_hh"]                                  # (1, 3H)
    b_gi = b_ih.at[:, :2 * H].add(b_hh[:, :2 * H])
    b_gh = jnp.concatenate(
        [jnp.zeros((1, 2 * H), b_hh.dtype), b_hh[:, 2 * H:]], axis=1)

    x2d = inp.reshape(S * B, I)                            # row-major flatten

    kernel = functools.partial(_gru_linear_kernel, seq_len=S, batch=B)

    x_flat, h_flat = pl.pallas_call(
        kernel,
        out_shape=(
            jax.ShapeDtypeStruct((S * B, O), jnp.float32),
            jax.ShapeDtypeStruct((S * B, H), jnp.float32),
        ),
        grid=(1,),                                         # whole sequence per step
        in_specs=[
            pl.BlockSpec((S * B, I), lambda i: (0, 0)),    # input chunk
            pl.BlockSpec((I, 3 * H), lambda i: (0, 0)),    # W_ih^T
            pl.BlockSpec((H, 3 * H), lambda i: (0, 0)),    # W_hh^T
            pl.BlockSpec((1, 3 * H), lambda i: (0, 0)),    # folded gi bias
            pl.BlockSpec((1, 3 * H), lambda i: (0, 0)),    # n-gate hh bias
            pl.BlockSpec((H, O), lambda i: (0, 0)),        # W_lin^T
            pl.BlockSpec((1, O), lambda i: (0, 0)),        # b_lin
        ],
        out_specs=(
            pl.BlockSpec((S * B, O), lambda i: (0, 0)),    # x slab
            pl.BlockSpec((S * B, H), lambda i: (0, 0)),    # out slab
        ),
        scratch_shapes=[pltpu.VMEM((S * B, 3 * H), jnp.float32)],
        compiler_params=pltpu.CompilerParams(
            dimension_semantics=("arbitrary",),            # single sequential step
        ),
    )(x2d, params["w_ih"], params["w_hh"], b_gi, b_gh,
      params["w_lin"], params["b_lin"])

    return x_flat.reshape(S, B, O), h_flat.reshape(S, B, H)


def init_params(key, input_size, hidden_size, output_size):
    """Deterministic synthetic init matching PyTorch parameter shapes
    (weights stored pre-transposed for right-multiplication)."""
    ks = jax.random.split(key, 6)
    k = 1.0 / np.sqrt(hidden_size)
    u = lambda kk, shape: jax.random.uniform(kk, shape, jnp.float32, -k, k)
    return {
        # PyTorch weight_ih_l0: (3H, I) -> stored as (I, 3H); gate order (r,z,n)
        "w_ih": u(ks[0], (input_size, 3 * hidden_size)),
        "w_hh": u(ks[1], (hidden_size, 3 * hidden_size)),
        "b_ih": u(ks[2], (1, 3 * hidden_size)),
        "b_hh": u(ks[3], (1, 3 * hidden_size)),
        # nn.Linear weight: (O, H) -> stored as (H, O)
        "w_lin": u(ks[4], (hidden_size, output_size)),
        "b_lin": u(ks[5], (1, output_size)),
    }


def reference_forward(inp, p):
    """Pure-JAX reference (lax.scan) with identical semantics to nn.GRU + Linear."""
    S, B, I = inp.shape
    H = p["w_hh"].shape[0]

    def step(h, x):
        gi = x @ p["w_ih"] + p["b_ih"]
        gh = h @ p["w_hh"] + p["b_hh"]
        i_r, i_z, i_n = gi[:, :H], gi[:, H:2 * H], gi[:, 2 * H:]
        h_r, h_z, h_n = gh[:, :H], gh[:, H:2 * H], gh[:, 2 * H:]
        r = jax.nn.sigmoid(i_r + h_r)
        z = jax.nn.sigmoid(i_z + h_z)
        n = jnp.tanh(i_n + r * h_n)
        h_new = (1.0 - z) * n + z * h
        return h_new, h_new

    h0 = jnp.zeros((B, H), jnp.float32)
    _, out = jax.lax.scan(step, h0, inp)
    x = out @ p["w_lin"] + p["b_lin"]
    return x, out


if __name__ == "__main__":
    SEQ, BATCH = 8, 2
    INPUT_SIZE, HIDDEN_SIZE, OUTPUT_SIZE = 4, 32, 8

    key = jax.random.PRNGKey(0)
    k_inp, k_par = jax.random.split(key)
    inp = jax.random.normal(k_inp, (SEQ, BATCH, INPUT_SIZE), jnp.float32)
    params = init_params(k_par, INPUT_SIZE, HIDDEN_SIZE, OUTPUT_SIZE)

    x, out = cognitive_net_forward(inp, params)
    jax.block_until_ready((x, out))

    x_ref, out_ref = reference_forward(inp, params)
    assert x.shape == (SEQ, BATCH, OUTPUT_SIZE)
    assert out.shape == (SEQ, BATCH, HIDDEN_SIZE)
    np.testing.assert_allclose(np.asarray(out), np.asarray(out_ref), rtol=1e-5, atol=1e-5)
    np.testing.assert_allclose(np.asarray(x), np.asarray(x_ref), rtol=1e-5, atol=1e-5)

    print("KERNEL_OK")
</pallas_src>

<mosaic_0001>
module attributes {stable_mosaic.version = 11 : i64} {
  func.func @_gru_linear_kernel(%arg0: i32, %arg1: memref<16x4xf32, #tpu.memory_space<vmem>>, %arg2: memref<4x96xf32, #tpu.memory_space<vmem>>, %arg3: memref<32x96xf32, #tpu.memory_space<vmem>>, %arg4: memref<1x96xf32, #tpu.memory_space<vmem>>, %arg5: memref<1x96xf32, #tpu.memory_space<vmem>>, %arg6: memref<32x8xf32, #tpu.memory_space<vmem>>, %arg7: memref<1x8xf32, #tpu.memory_space<vmem>>, %arg8: memref<16x8xf32, #tpu.memory_space<vmem>>, %arg9: memref<16x32xf32, #tpu.memory_space<vmem>>, %arg10: memref<16x96xf32, #tpu.memory_space<vmem>>) attributes {dimension_semantics = [#tpu.dimension_semantics<arbitrary>], iteration_bounds = array<i64: 1>, scalar_prefetch = 0 : i64, scratch_operands = 1 : i64, tpu.core_type = #tpu.core_type<tc>, window_params = [{pipeline_mode = #tpu.pipeline_mode<synchronous>, transform_indices = @transform_0, window_bounds = array<i64: 16, 4>}, {pipeline_mode = #tpu.pipeline_mode<synchronous>, transform_indices = @transform_1, window_bounds = array<i64: 4, 96>}, {pipeline_mode = #tpu.pipeline_mode<synchronous>, transform_indices = @transform_2, window_bounds = array<i64: 32, 96>}, {pipeline_mode = #tpu.pipeline_mode<synchronous>, transform_indices = @transform_3, window_bounds = array<i64: 1, 96>}, {pipeline_mode = #tpu.pipeline_mode<synchronous>, transform_indices = @transform_4, window_bounds = array<i64: 1, 96>}, {pipeline_mode = #tpu.pipeline_mode<synchronous>, transform_indices = @transform_5, window_bounds = array<i64: 32, 8>}, {pipeline_mode = #tpu.pipeline_mode<synchronous>, transform_indices = @transform_6, window_bounds = array<i64: 1, 8>}, {pipeline_mode = #tpu.pipeline_mode<synchronous>, transform_indices = @transform_7, window_bounds = array<i64: 16, 8>}, {pipeline_mode = #tpu.pipeline_mode<synchronous>, transform_indices = @transform_8, window_bounds = array<i64: 16, 32>}]} {
    %c0 = arith.constant 0 : index
    %c0_0 = arith.constant 0 : index
    %0 = vector.load %arg1[%c0, %c0_0] : memref<16x4xf32, #tpu.memory_space<vmem>>, vector<16x4xf32>
    %c0_1 = arith.constant 0 : index
    %c0_2 = arith.constant 0 : index
    %1 = vector.load %arg2[%c0_1, %c0_2] : memref<4x96xf32, #tpu.memory_space<vmem>>, vector<4x96xf32>
    %cst = arith.constant dense<0.000000e+00> : vector<16x96xf32>
    %2 = tpu.matmul %0, %1, %cst {dimension_numbers = #tpu.dot_dimension_numbers<[1], [0], [0], [1], [0, 0, 1, 1], [], []>} : vector<16x4xf32>, vector<4x96xf32>, vector<16x96xf32> -> vector<16x96xf32>
    %c0_3 = arith.constant 0 : index
    %c0_4 = arith.constant 0 : index
    %3 = vector.load %arg4[%c0_3, %c0_4] : memref<1x96xf32, #tpu.memory_space<vmem>>, vector<1x96xf32>
    %4 = vector.broadcast %3 : vector<1x96xf32> to vector<16x96xf32>
    %5 = arith.addf %2, %4 : vector<16x96xf32>
    %c0_5 = arith.constant 0 : index
    %c0_6 = arith.constant 0 : index
    %6 = vector.load %arg10[%c0_5, %c0_6] : memref<16x96xf32, #tpu.memory_space<vmem>>, vector<16x96xf32>
    tpu.vector_store %arg10[%c0_5, %c0_6], %5 {strides = array<i32>} : memref<16x96xf32, #tpu.memory_space<vmem>>, vector<16x96xf32>,
    %c0_7 = arith.constant 0 : index
    %c0_8 = arith.constant 0 : index
    %7 = vector.load %arg3[%c0_7, %c0_8] : memref<32x96xf32, #tpu.memory_space<vmem>>, vector<32x96xf32>
    %c0_9 = arith.constant 0 : index
    %c0_10 = arith.constant 0 : index
    %8 = vector.load %arg5[%c0_9, %c0_10] : memref<1x96xf32, #tpu.memory_space<vmem>>, vector<1x96xf32>
    %cst_11 = arith.constant 0.000000e+00 : f32
    %9 = vector.broadcast %cst_11 : f32 to vector<2x32xf32>
    %c0_12 = arith.constant 0 : index
    %c0_13 = arith.constant 0 : index
    %10 = vector.load %arg10[%c0_12, %c0_13] : memref<16x96xf32, #tpu.memory_space<vmem>>, vector<2x96xf32>
    %cst_14 = arith.constant dense<0.000000e+00> : vector<2x96xf32>
    %11 = tpu.matmul %9, %7, %cst_14 {dimension_numbers = #tpu.dot_dimension_numbers<[1], [0], [0], [1], [0, 0, 1, 1], [], []>} : vector<2x32xf32>, vector<32x96xf32>, vector<2x96xf32> -> vector<2x96xf32>
    %12 = vector.broadcast %8 : vector<1x96xf32> to vector<2x96xf32>
    %13 = arith.addf %11, %12 : vector<2x96xf32>
    %14 = vector.extract_strided_slice %10 {offsets = [0, 0], sizes = [2, 32], strides = [1, 1]} : vector<2x96xf32> to vector<2x32xf32>
    %15 = vector.extract_strided_slice %10 {offsets = [0, 32], sizes = [2, 32], strides = [1, 1]} : vector<2x96xf32> to vector<2x32xf32>
    %16 = vector.extract_strided_slice %10 {offsets = [0, 64], sizes = [2, 32], strides = [1, 1]} : vector<2x96xf32> to vector<2x32xf32>
    %17 = vector.extract_strided_slice %13 {offsets = [0, 0], sizes = [2, 32], strides = [1, 1]} : vector<2x96xf32> to vector<2x32xf32>
    %18 = vector.extract_strided_slice %13 {offsets = [0, 32], sizes = [2, 32], strides = [1, 1]} : vector<2x96xf32> to vector<2x32xf32>
    %19 = vector.extract_strided_slice %13 {offsets = [0, 64], sizes = [2, 32], strides = [1, 1]} : vector<2x96xf32> to vector<2x32xf32>
    %20 = arith.addf %14, %17 : vector<2x32xf32>
    %21 = arith.negf %20 : vector<2x32xf32>
    %22 = math.exp %21 : vector<2x32xf32>
    %cst_15 = arith.constant 1.000000e+00 : f32
    %23 = vector.broadcast %cst_15 : f32 to vector<2x32xf32>
    %24 = arith.addf %23, %22 : vector<2x32xf32>
    %25 = arith.divf %23, %24 : vector<2x32xf32>
    %26 = arith.addf %15, %18 : vector<2x32xf32>
    %27 = arith.negf %26 : vector<2x32xf32>
    %28 = math.exp %27 : vector<2x32xf32>
    %cst_16 = arith.constant 1.000000e+00 : f32
    %29 = vector.broadcast %cst_16 : f32 to vector<2x32xf32>
    %30 = arith.addf %29, %28 : vector<2x32xf32>
    %31 = arith.divf %29, %30 : vector<2x32xf32>
    %32 = arith.mulf %25, %19 : vector<2x32xf32>
    %33 = arith.addf %16, %32 : vector<2x32xf32>
    %34 = math.tanh %33 : vector<2x32xf32>
    %cst_17 = arith.constant 1.000000e+00 : f32
    %35 = vector.broadcast %cst_17 : f32 to vector<2x32xf32>
    %36 = arith.subf %35, %31 : vector<2x32xf32>
    %37 = arith.mulf %36, %34 : vector<2x32xf32>
    %38 = arith.mulf %31, %9 : vector<2x32xf32>
    %39 = arith.addf %37, %38 : vector<2x32xf32>
    %c0_18 = arith.constant 0 : index
    %c0_19 = arith.constant 0 : index
    %40 = vector.load %arg9[%c0_18, %c0_19] : memref<16x32xf32, #tpu.memory_space<vmem>>, vector<2x32xf32>
    tpu.vector_store %arg9[%c0_18, %c0_19], %39 {strides = array<i32>} : memref<16x32xf32, #tpu.memory_space<vmem>>, vector<2x32xf32>,
    %c2 = arith.constant 2 : index
    %c0_20 = arith.constant 0 : index
    %41 = vector.load %arg10[%c2, %c0_20] : memref<16x96xf32, #tpu.memory_space<vmem>>, vector<2x96xf32>
    %cst_21 = arith.constant dense<0.000000e+00> : vector<2x96xf32>
    %42 = tpu.matmul %39, %7, %cst_21 {dimension_numbers = #tpu.dot_dimension_numbers<[1], [0], [0], [1], [0, 0, 1, 1], [], []>} : vector<2x32xf32>, vector<32x96xf32>, vector<2x96xf32> -> vector<2x96xf32>
    %43 = vector.broadcast %8 : vector<1x96xf32> to vector<2x96xf32>
    %44 = arith.addf %42, %43 : vector<2x96xf32>
    %45 = vector.extract_strided_slice %41 {offsets = [0, 0], sizes = [2, 32], strides = [1, 1]} : vector<2x96xf32> to vector<2x32xf32>
    %46 = vector.extract_strided_slice %41 {offsets = [0, 32], sizes = [2, 32], strides = [1, 1]} : vector<2x96xf32> to vector<2x32xf32>
    %47 = vector.extract_strided_slice %41 {offsets = [0, 64], sizes = [2, 32], strides = [1, 1]} : vector<2x96xf32> to vector<2x32xf32>
    %48 = vector.extract_strided_slice %44 {offsets = [0, 0], sizes = [2, 32], strides = [1, 1]} : vector<2x96xf32> to vector<2x32xf32>
    %49 = vector.extract_strided_slice %44 {offsets = [0, 32], sizes = [2, 32], strides = [1, 1]} : vector<2x96xf32> to vector<2x32xf32>
    %50 = vector.extract_strided_slice %44 {offsets = [0, 64], sizes = [2, 32], strides = [1, 1]} : vector<2x96xf32> to vector<2x32xf32>
    %51 = arith.addf %45, %48 : vector<2x32xf32>
    %52 = arith.negf %51 : vector<2x32xf32>
    %53 = math.exp %52 : vector<2x32xf32>
    %cst_22 = arith.constant 1.000000e+00 : f32
    %54 = vector.broadcast %cst_22 : f32 to vector<2x32xf32>
    %55 = arith.addf %54, %53 : vector<2x32xf32>
    %56 = arith.divf %54, %55 : vector<2x32xf32>
    %57 = arith.addf %46, %49 : vector<2x32xf32>
    %58 = arith.negf %57 : vector<2x32xf32>
    %59 = math.exp %58 : vector<2x32xf32>
    %cst_23 = arith.constant 1.000000e+00 : f32
    %60 = vector.broadcast %cst_23 : f32 to vector<2x32xf32>
    %61 = arith.addf %60, %59 : vector<2x32xf32>
    %62 = arith.divf %60, %61 : vector<2x32xf32>
    %63 = arith.mulf %56, %50 : vector<2x32xf32>
    %64 = arith.addf %47, %63 : vector<2x32xf32>
    %65 = math.tanh %64 : vector<2x32xf32>
    %cst_24 = arith.constant 1.000000e+00 : f32
    %66 = vector.broadcast %cst_24 : f32 to vector<2x32xf32>
    %67 = arith.subf %66, %62 : vector<2x32xf32>
    %68 = arith.mulf %67, %65 : vector<2x32xf32>
    %69 = arith.mulf %62, %39 : vector<2x32xf32>
    %70 = arith.addf %68, %69 : vector<2x32xf32>
    %c2_25 = arith.constant 2 : index
    %c0_26 = arith.constant 0 : index
    %71 = vector.load %arg9[%c2_25, %c0_26] : memref<16x32xf32, #tpu.memory_space<vmem>>, vector<2x32xf32>
    tpu.vector_store %arg9[%c2_25, %c0_26], %70 {strides = array<i32>} : memref<16x32xf32, #tpu.memory_space<vmem>>, vector<2x32xf32>,
    %c4 = arith.constant 4 : index
    %c0_27 = arith.constant 0 : index
    %72 = vector.load %arg10[%c4, %c0_27] : memref<16x96xf32, #tpu.memory_space<vmem>>, vector<2x96xf32>
    %cst_28 = arith.constant dense<0.000000e+00> : vector<2x96xf32>
    %73 = tpu.matmul %70, %7, %cst_28 {dimension_numbers = #tpu.dot_dimension_numbers<[1], [0], [0], [1], [0, 0, 1, 1], [], []>} : vector<2x32xf32>, vector<32x96xf32>, vector<2x96xf32> -> vector<2x96xf32>
    %74 = vector.broadcast %8 : vector<1x96xf32> to vector<2x96xf32>
    %75 = arith.addf %73, %74 : vector<2x96xf32>
    %76 = vector.extract_strided_slice %72 {offsets = [0, 0], sizes = [2, 32], strides = [1, 1]} : vector<2x96xf32> to vector<2x32xf32>
    %77 = vector.extract_strided_slice %72 {offsets = [0, 32], sizes = [2, 32], strides = [1, 1]} : vector<2x96xf32> to vector<2x32xf32>
    %78 = vector.extract_strided_slice %72 {offsets = [0, 64], sizes = [2, 32], strides = [1, 1]} : vector<2x96xf32> to vector<2x32xf32>
    %79 = vector.extract_strided_slice %75 {offsets = [0, 0], sizes = [2, 32], strides = [1, 1]} : vector<2x96xf32> to vector<2x32xf32>
    %80 = vector.extract_strided_slice %75 {offsets = [0, 32], sizes = [2, 32], strides = [1, 1]} : vector<2x96xf32> to vector<2x32xf32>
    %81 = vector.extract_strided_slice %75 {offsets = [0, 64], sizes = [2, 32], strides = [1, 1]} : vector<2x96xf32> to vector<2x32xf32>
    %82 = arith.addf %76, %79 : vector<2x32xf32>
    %83 = arith.negf %82 : vector<2x32xf32>
    %84 = math.exp %83 : vector<2x32xf32>
    %cst_29 = arith.constant 1.000000e+00 : f32
    %85 = vector.broadcast %cst_29 : f32 to vector<2x32xf32>
    %86 = arith.addf %85, %84 : vector<2x32xf32>
    %87 = arith.divf %85, %86 : vector<2x32xf32>
    %88 = arith.addf %77, %80 : vector<2x32xf32>
    %89 = arith.negf %88 : vector<2x32xf32>
    %90 = math.exp %89 : vector<2x32xf32>
    %cst_30 = arith.constant 1.000000e+00 : f32
    %91 = vector.broadcast %cst_30 : f32 to vector<2x32xf32>
    %92 = arith.addf %91, %90 : vector<2x32xf32>
    %93 = arith.divf %91, %92 : vector<2x32xf32>
    %94 = arith.mulf %87, %81 : vector<2x32xf32>
    %95 = arith.addf %78, %94 : vector<2x32xf32>
    %96 = math.tanh %95 : vector<2x32xf32>
    %cst_31 = arith.constant 1.000000e+00 : f32
    %97 = vector.broadcast %cst_31 : f32 to vector<2x32xf32>
    %98 = arith.subf %97, %93 : vector<2x32xf32>
    %99 = arith.mulf %98, %96 : vector<2x32xf32>
    %100 = arith.mulf %93, %70 : vector<2x32xf32>
    %101 = arith.addf %99, %100 : vector<2x32xf32>
    %c4_32 = arith.constant 4 : index
    %c0_33 = arith.constant 0 : index
    %102 = vector.load %arg9[%c4_32, %c0_33] : memref<16x32xf32, #tpu.memory_space<vmem>>, vector<2x32xf32>
    tpu.vector_store %arg9[%c4_32, %c0_33], %101 {strides = array<i32>} : memref<16x32xf32, #tpu.memory_space<vmem>>, vector<2x32xf32>,
    %c6 = arith.constant 6 : index
    %c0_34 = arith.constant 0 : index
    %103 = vector.load %arg10[%c6, %c0_34] : memref<16x96xf32, #tpu.memory_space<vmem>>, vector<2x96xf32>
    %cst_35 = arith.constant dense<0.000000e+00> : vector<2x96xf32>
    %104 = tpu.matmul %101, %7, %cst_35 {dimension_numbers = #tpu.dot_dimension_numbers<[1], [0], [0], [1], [0, 0, 1, 1], [], []>} : vector<2x32xf32>, vector<32x96xf32>, vector<2x96xf32> -> vector<2x96xf32>
    %105 = vector.broadcast %8 : vector<1x96xf32> to vector<2x96xf32>
    %106 = arith.addf %104, %105 : vector<2x96xf32>
    %107 = vector.extract_strided_slice %103 {offsets = [0, 0], sizes = [2, 32], strides = [1, 1]} : vector<2x96xf32> to vector<2x32xf32>
    %108 = vector.extract_strided_slice %103 {offsets = [0, 32], sizes = [2, 32], strides = [1, 1]} : vector<2x96xf32> to vector<2x32xf32>
    %109 = vector.extract_strided_slice %103 {offsets = [0, 64], sizes = [2, 32], strides = [1, 1]} : vector<2x96xf32> to vector<2x32xf32>
    %110 = vector.extract_strided_slice %106 {offsets = [0, 0], sizes = [2, 32], strides = [1, 1]} : vector<2x96xf32> to vector<2x32xf32>
    %111 = vector.extract_strided_slice %106 {offsets = [0, 32], sizes = [2, 32], strides = [1, 1]} : vector<2x96xf32> to vector<2x32xf32>
    %112 = vector.extract_strided_slice %106 {offsets = [0, 64], sizes = [2, 32], strides = [1, 1]} : vector<2x96xf32> to vector<2x32xf32>
    %113 = arith.addf %107, %110 : vector<2x32xf32>
    %114 = arith.negf %113 : vector<2x32xf32>
    %115 = math.exp %114 : vector<2x32xf32>
    %cst_36 = arith.constant 1.000000e+00 : f32
    %116 = vector.broadcast %cst_36 : f32 to vector<2x32xf32>
    %117 = arith.addf %116, %115 : vector<2x32xf32>
    %118 = arith.divf %116, %117 : vector<2x32xf32>
    %119 = arith.addf %108, %111 : vector<2x32xf32>
    %120 = arith.negf %119 : vector<2x32xf32>
    %121 = math.exp %120 : vector<2x32xf32>
    %cst_37 = arith.constant 1.000000e+00 : f32
    %122 = vector.broadcast %cst_37 : f32 to vector<2x32xf32>
    %123 = arith.addf %122, %121 : vector<2x32xf32>
    %124 = arith.divf %122, %123 : vector<2x32xf32>
    %125 = arith.mulf %118, %112 : vector<2x32xf32>
    %126 = arith.addf %109, %125 : vector<2x32xf32>
    %127 = math.tanh %126 : vector<2x32xf32>
    %cst_38 = arith.constant 1.000000e+00 : f32
    %128 = vector.broadcast %cst_38 : f32 to vector<2x32xf32>
    %129 = arith.subf %128, %124 : vector<2x32xf32>
    %130 = arith.mulf %129, %127 : vector<2x32xf32>
    %131 = arith.mulf %124, %101 : vector<2x32xf32>
    %132 = arith.addf %130, %131 : vector<2x32xf32>
    %c6_39 = arith.constant 6 : index
    %c0_40 = arith.constant 0 : index
    %133 = vector.load %arg9[%c6_39, %c0_40] : memref<16x32xf32, #tpu.memory_space<vmem>>, vector<2x32xf32>
    tpu.vector_store %arg9[%c6_39, %c0_40], %132 {strides = array<i32>} : memref<16x32xf32, #tpu.memory_space<vmem>>, vector<2x32xf32>,
    %c8 = arith.constant 8 : index
    %c0_41 = arith.constant 0 : index
    %134 = vector.load %arg10[%c8, %c0_41] : memref<16x96xf32, #tpu.memory_space<vmem>>, vector<2x96xf32>
    %cst_42 = arith.constant dense<0.000000e+00> : vector<2x96xf32>
    %135 = tpu.matmul %132, %7, %cst_42 {dimension_numbers = #tpu.dot_dimension_numbers<[1], [0], [0], [1], [0, 0, 1, 1], [], []>} : vector<2x32xf32>, vector<32x96xf32>, vector<2x96xf32> -> vector<2x96xf32>
    %136 = vector.broadcast %8 : vector<1x96xf32> to vector<2x96xf32>
    %137 = arith.addf %135, %136 : vector<2x96xf32>
    %138 = vector.extract_strided_slice %134 {offsets = [0, 0], sizes = [2, 32], strides = [1, 1]} : vector<2x96xf32> to vector<2x32xf32>
    %139 = vector.extract_strided_slice %134 {offsets = [0, 32], sizes = [2, 32], strides = [1, 1]} : vector<2x96xf32> to vector<2x32xf32>
    %140 = vector.extract_strided_slice %134 {offsets = [0, 64], sizes = [2, 32], strides = [1, 1]} : vector<2x96xf32> to vector<2x32xf32>
    %141 = vector.extract_strided_slice %137 {offsets = [0, 0], sizes = [2, 32], strides = [1, 1]} : vector<2x96xf32> to vector<2x32xf32>
    %142 = vector.extract_strided_slice %137 {offsets = [0, 32], sizes = [2, 32], strides = [1, 1]} : vector<2x96xf32> to vector<2x32xf32>
    %143 = vector.extract_strided_slice %137 {offsets = [0, 64], sizes = [2, 32], strides = [1, 1]} : vector<2x96xf32> to vector<2x32xf32>
    %144 = arith.addf %138, %141 : vector<2x32xf32>
    %145 = arith.negf %144 : vector<2x32xf32>
    %146 = math.exp %145 : vector<2x32xf32>
    %cst_43 = arith.constant 1.000000e+00 : f32
    %147 = vector.broadcast %cst_43 : f32 to vector<2x32xf32>
    %148 = arith.addf %147, %146 : vector<2x32xf32>
    %149 = arith.divf %147, %148 : vector<2x32xf32>
    %150 = arith.addf %139, %142 : vector<2x32xf32>
    %151 = arith.negf %150 : vector<2x32xf32>
    %152 = math.exp %151 : vector<2x32xf32>
    %cst_44 = arith.constant 1.000000e+00 : f32
    %153 = vector.broadcast %cst_44 : f32 to vector<2x32xf32>
    %154 = arith.addf %153, %152 : vector<2x32xf32>
    %155 = arith.divf %153, %154 : vector<2x32xf32>
    %156 = arith.mulf %149, %143 : vector<2x32xf32>
    %157 = arith.addf %140, %156 : vector<2x32xf32>
    %158 = math.tanh %157 : vector<2x32xf32>
    %cst_45 = arith.constant 1.000000e+00 : f32
    %159 = vector.broadcast %cst_45 : f32 to vector<2x32xf32>
    %160 = arith.subf %159, %155 : vector<2x32xf32>
    %161 = arith.mulf %160, %158 : vector<2x32xf32>
    %162 = arith.mulf %155, %132 : vector<2x32xf32>
    %163 = arith.addf %161, %162 : vector<2x32xf32>
    %c8_46 = arith.constant 8 : index
    %c0_47 = arith.constant 0 : index
    %164 = vector.load %arg9[%c8_46, %c0_47] : memref<16x32xf32, #tpu.memory_space<vmem>>, vector<2x32xf32>
    tpu.vector_store %arg9[%c8_46, %c0_47], %163 {strides = array<i32>} : memref<16x32xf32, #tpu.memory_space<vmem>>, vector<2x32xf32>,
    %c10 = arith.constant 10 : index
    %c0_48 = arith.constant 0 : index
    %165 = vector.load %arg10[%c10, %c0_48] : memref<16x96xf32, #tpu.memory_space<vmem>>, vector<2x96xf32>
    %cst_49 = arith.constant dense<0.000000e+00> : vector<2x96xf32>
    %166 = tpu.matmul %163, %7, %cst_49 {dimension_numbers = #tpu.dot_dimension_numbers<[1], [0], [0], [1], [0, 0, 1, 1], [], []>} : vector<2x32xf32>, vector<32x96xf32>, vector<2x96xf32> -> vector<2x96xf32>
    %167 = vector.broadcast %8 : vector<1x96xf32> to vector<2x96xf32>
    %168 = arith.addf %166, %167 : vector<2x96xf32>
    %169 = vector.extract_strided_slice %165 {offsets = [0, 0], sizes = [2, 32], strides = [1, 1]} : vector<2x96xf32> to vector<2x32xf32>
    %170 = vector.extract_strided_slice %165 {offsets = [0, 32], sizes = [2, 32], strides = [1, 1]} : vector<2x96xf32> to vector<2x32xf32>
    %171 = vector.extract_strided_slice %165 {offsets = [0, 64], sizes = [2, 32], strides = [1, 1]} : vector<2x96xf32> to vector<2x32xf32>
    %172 = vector.extract_strided_slice %168 {offsets = [0, 0], sizes = [2, 32], strides = [1, 1]} : vector<2x96xf32> to vector<2x32xf32>
    %173 = vector.extract_strided_slice %168 {offsets = [0, 32], sizes = [2, 32], strides = [1, 1]} : vector<2x96xf32> to vector<2x32xf32>
    %174 = vector.extract_strided_slice %168 {offsets = [0, 64], sizes = [2, 32], strides = [1, 1]} : vector<2x96xf32> to vector<2x32xf32>
    %175 = arith.addf %169, %172 : vector<2x32xf32>
    %176 = arith.negf %175 : vector<2x32xf32>
    %177 = math.exp %176 : vector<2x32xf32>
    %cst_50 = arith.constant 1.000000e+00 : f32
    %178 = vector.broadcast %cst_50 : f32 to vector<2x32xf32>
    %179 = arith.addf %178, %177 : vector<2x32xf32>
    %180 = arith.divf %178, %179 : vector<2x32xf32>
    %181 = arith.addf %170, %173 : vector<2x32xf32>
    %182 = arith.negf %181 : vector<2x32xf32>
    %183 = math.exp %182 : vector<2x32xf32>
    %cst_51 = arith.constant 1.000000e+00 : f32
    %184 = vector.broadcast %cst_51 : f32 to vector<2x32xf32>
    %185 = arith.addf %184, %183 : vector<2x32xf32>
    %186 = arith.divf %184, %185 : vector<2x32xf32>
    %187 = arith.mulf %180, %174 : vector<2x32xf32>
    %188 = arith.addf %171, %187 : vector<2x32xf32>
    %189 = math.tanh %188 : vector<2x32xf32>
    %cst_52 = arith.constant 1.000000e+00 : f32
    %190 = vector.broadcast %cst_52 : f32 to vector<2x32xf32>
    %191 = arith.subf %190, %186 : vector<2x32xf32>
    %192 = arith.mulf %191, %189 : vector<2x32xf32>
    %193 = arith.mulf %186, %163 : vector<2x32xf32>
    %194 = arith.addf %192, %193 : vector<2x32xf32>
    %c10_53 = arith.constant 10 : index
    %c0_54 = arith.constant 0 : index
    %195 = vector.load %arg9[%c10_53, %c0_54] : memref<16x32xf32, #tpu.memory_space<vmem>>, vector<2x32xf32>
    tpu.vector_store %arg9[%c10_53, %c0_54], %194 {strides = array<i32>} : memref<16x32xf32, #tpu.memory_space<vmem>>, vector<2x32xf32>,
    %c12 = arith.constant 12 : index
    %c0_55 = arith.constant 0 : index
    %196 = vector.load %arg10[%c12, %c0_55] : memref<16x96xf32, #tpu.memory_space<vmem>>, vector<2x96xf32>
    %cst_56 = arith.constant dense<0.000000e+00> : vector<2x96xf32>
    %197 = tpu.matmul %194, %7, %cst_56 {dimension_numbers = #tpu.dot_dimension_numbers<[1], [0], [0], [1], [0, 0, 1, 1], [], []>} : vector<2x32xf32>, vector<32x96xf32>, vector<2x96xf32> -> vector<2x96xf32>
    %198 = vector.broadcast %8 : vector<1x96xf32> to vector<2x96xf32>
    %199 = arith.addf %197, %198 : vector<2x96xf32>
    %200 = vector.extract_strided_slice %196 {offsets = [0, 0], sizes = [2, 32], strides = [1, 1]} : vector<2x96xf32> to vector<2x32xf32>
    %201 = vector.extract_strided_slice %196 {offsets = [0, 32], sizes = [2, 32], strides = [1, 1]} : vector<2x96xf32> to vector<2x32xf32>
    %202 = vector.extract_strided_slice %196 {offsets = [0, 64], sizes = [2, 32], strides = [1, 1]} : vector<2x96xf32> to vector<2x32xf32>
    %203 = vector.extract_strided_slice %199 {offsets = [0, 0], sizes = [2, 32], strides = [1, 1]} : vector<2x96xf32> to vector<2x32xf32>
    %204 = vector.extract_strided_slice %199 {offsets = [0, 32], sizes = [2, 32], strides = [1, 1]} : vector<2x96xf32> to vector<2x32xf32>
    %205 = vector.extract_strided_slice %199 {offsets = [0, 64], sizes = [2, 32], strides = [1, 1]} : vector<2x96xf32> to vector<2x32xf32>
    %206 = arith.addf %200, %203 : vector<2x32xf32>
    %207 = arith.negf %206 : vector<2x32xf32>
    %208 = math.exp %207 : vector<2x32xf32>
    %cst_57 = arith.constant 1.000000e+00 : f32
    %209 = vector.broadcast %cst_57 : f32 to vector<2x32xf32>
    %210 = arith.addf %209, %208 : vector<2x32xf32>
    %211 = arith.divf %209, %210 : vector<2x32xf32>
    %212 = arith.addf %201, %204 : vector<2x32xf32>
    %213 = arith.negf %212 : vector<2x32xf32>
    %214 = math.exp %213 : vector<2x32xf32>
    %cst_58 = arith.constant 1.000000e+00 : f32
    %215 = vector.broadcast %cst_58 : f32 to vector<2x32xf32>
    %216 = arith.addf %215, %214 : vector<2x32xf32>
    %217 = arith.divf %215, %216 : vector<2x32xf32>
    %218 = arith.mulf %211, %205 : vector<2x32xf32>
    %219 = arith.addf %202, %218 : vector<2x32xf32>
    %220 = math.tanh %219 : vector<2x32xf32>
    %cst_59 = arith.constant 1.000000e+00 : f32
    %221 = vector.broadcast %cst_59 : f32 to vector<2x32xf32>
    %222 = arith.subf %221, %217 : vector<2x32xf32>
    %223 = arith.mulf %222, %220 : vector<2x32xf32>
    %224 = arith.mulf %217, %194 : vector<2x32xf32>
    %225 = arith.addf %223, %224 : vector<2x32xf32>
    %c12_60 = arith.constant 12 : index
    %c0_61 = arith.constant 0 : index
    %226 = vector.load %arg9[%c12_60, %c0_61] : memref<16x32xf32, #tpu.memory_space<vmem>>, vector<2x32xf32>
    tpu.vector_store %arg9[%c12_60, %c0_61], %225 {strides = array<i32>} : memref<16x32xf32, #tpu.memory_space<vmem>>, vector<2x32xf32>,
    %c14 = arith.constant 14 : index
    %c0_62 = arith.constant 0 : index
    %227 = vector.load %arg10[%c14, %c0_62] : memref<16x96xf32, #tpu.memory_space<vmem>>, vector<2x96xf32>
    %cst_63 = arith.constant dense<0.000000e+00> : vector<2x96xf32>
    %228 = tpu.matmul %225, %7, %cst_63 {dimension_numbers = #tpu.dot_dimension_numbers<[1], [0], [0], [1], [0, 0, 1, 1], [], []>} : vector<2x32xf32>, vector<32x96xf32>, vector<2x96xf32> -> vector<2x96xf32>
    %229 = vector.broadcast %8 : vector<1x96xf32> to vector<2x96xf32>
    %230 = arith.addf %228, %229 : vector<2x96xf32>
    %231 = vector.extract_strided_slice %227 {offsets = [0, 0], sizes = [2, 32], strides = [1, 1]} : vector<2x96xf32> to vector<2x32xf32>
    %232 = vector.extract_strided_slice %227 {offsets = [0, 32], sizes = [2, 32], strides = [1, 1]} : vector<2x96xf32> to vector<2x32xf32>
    %233 = vector.extract_strided_slice %227 {offsets = [0, 64], sizes = [2, 32], strides = [1, 1]} : vector<2x96xf32> to vector<2x32xf32>
    %234 = vector.extract_strided_slice %230 {offsets = [0, 0], sizes = [2, 32], strides = [1, 1]} : vector<2x96xf32> to vector<2x32xf32>
    %235 = vector.extract_strided_slice %230 {offsets = [0, 32], sizes = [2, 32], strides = [1, 1]} : vector<2x96xf32> to vector<2x32xf32>
    %236 = vector.extract_strided_slice %230 {offsets = [0, 64], sizes = [2, 32], strides = [1, 1]} : vector<2x96xf32> to vector<2x32xf32>
    %237 = arith.addf %231, %234 : vector<2x32xf32>
    %238 = arith.negf %237 : vector<2x32xf32>
    %239 = math.exp %238 : vector<2x32xf32>
    %cst_64 = arith.constant 1.000000e+00 : f32
    %240 = vector.broadcast %cst_64 : f32 to vector<2x32xf32>
    %241 = arith.addf %240, %239 : vector<2x32xf32>
    %242 = arith.divf %240, %241 : vector<2x32xf32>
    %243 = arith.addf %232, %235 : vector<2x32xf32>
    %244 = arith.negf %243 : vector<2x32xf32>
    %245 = math.exp %244 : vector<2x32xf32>
    %cst_65 = arith.constant 1.000000e+00 : f32
    %246 = vector.broadcast %cst_65 : f32 to vector<2x32xf32>
    %247 = arith.addf %246, %245 : vector<2x32xf32>
    %248 = arith.divf %246, %247 : vector<2x32xf32>
    %249 = arith.mulf %242, %236 : vector<2x32xf32>
    %250 = arith.addf %233, %249 : vector<2x32xf32>
    %251 = math.tanh %250 : vector<2x32xf32>
    %cst_66 = arith.constant 1.000000e+00 : f32
    %252 = vector.broadcast %cst_66 : f32 to vector<2x32xf32>
    %253 = arith.subf %252, %248 : vector<2x32xf32>
    %254 = arith.mulf %253, %251 : vector<2x32xf32>
    %255 = arith.mulf %248, %225 : vector<2x32xf32>
    %256 = arith.addf %254, %255 : vector<2x32xf32>
    %c14_67 = arith.constant 14 : index
    %c0_68 = arith.constant 0 : index
    %257 = vector.load %arg9[%c14_67, %c0_68] : memref<16x32xf32, #tpu.memory_space<vmem>>, vector<2x32xf32>
    tpu.vector_store %arg9[%c14_67, %c0_68], %256 {strides = array<i32>} : memref<16x32xf32, #tpu.memory_space<vmem>>, vector<2x32xf32>,
    %c0_69 = arith.constant 0 : index
    %c0_70 = arith.constant 0 : index
    %258 = vector.load %arg9[%c0_69, %c0_70] : memref<16x32xf32, #tpu.memory_space<vmem>>, vector<16x32xf32>
    %c0_71 = arith.constant 0 : index
    %c0_72 = arith.constant 0 : index
    %259 = vector.load %arg6[%c0_71, %c0_72] : memref<32x8xf32, #tpu.memory_space<vmem>>, vector<32x8xf32>
    %cst_73 = arith.constant dense<0.000000e+00> : vector<16x8xf32>
    %260 = tpu.matmul %258, %259, %cst_73 {dimension_numbers = #tpu.dot_dimension_numbers<[1], [0], [0], [1], [0, 0, 1, 1], [], []>} : vector<16x32xf32>, vector<32x8xf32>, vector<16x8xf32> -> vector<16x8xf32>
    %c0_74 = arith.constant 0 : index
    %c0_75 = arith.constant 0 : index
    %261 = vector.load %arg7[%c0_74, %c0_75] : memref<1x8xf32, #tpu.memory_space<vmem>>, vector<1x8xf32>
    %262 = vector.broadcast %261 : vector<1x8xf32> to vector<16x8xf32>
    %263 = arith.addf %260, %262 : vector<16x8xf32>
    %c0_76 = arith.constant 0 : index
    %c0_77 = arith.constant 0 : index
    %264 = vector.load %arg8[%c0_76, %c0_77] : memref<16x8xf32, #tpu.memory_space<vmem>>, vector<16x8xf32>
    tpu.vector_store %arg8[%c0_76, %c0_77], %263 {strides = array<i32>} : memref<16x8xf32, #tpu.memory_space<vmem>>, vector<16x8xf32>,
    return
  }
  func.func @transform_0(%arg0: i32) -> (i32, i32) {
    %c0_i32 = arith.constant 0 : i32
    %c0_i32_0 = arith.constant 0 : i32
    %c0_i32_1 = arith.constant 0 : i32
    return %c0_i32, %c0_i32_0 : i32, i32
  }
  func.func @transform_1(%arg0: i32) -> (i32, i32) {
    %c0_i32 = arith.constant 0 : i32
    %c0_i32_0 = arith.constant 0 : i32
    %c0_i32_1 = arith.constant 0 : i32
    return %c0_i32, %c0_i32_0 : i32, i32
  }
  func.func @transform_2(%arg0: i32) -> (i32, i32) {
    %c0_i32 = arith.constant 0 : i32
    %c0_i32_0 = arith.constant 0 : i32
    %c0_i32_1 = arith.constant 0 : i32
    return %c0_i32, %c0_i32_0 : i32, i32
  }
  func.func @transform_3(%arg0: i32) -> (i32, i32) {
    %c0_i32 = arith.constant 0 : i32
    %c0_i32_0 = arith.constant 0 : i32
    %c0_i32_1 = arith.constant 0 : i32
    return %c0_i32, %c0_i32_0 : i32, i32
  }
  func.func @transform_4(%arg0: i32) -> (i32, i32) {
    %c0_i32 = arith.constant 0 : i32
    %c0_i32_0 = arith.constant 0 : i32
    %c0_i32_1 = arith.constant 0 : i32
    return %c0_i32, %c0_i32_0 : i32, i32
  }
  func.func @transform_5(%arg0: i32) -> (i32, i32) {
    %c0_i32 = arith.constant 0 : i32
    %c0_i32_0 = arith.constant 0 : i32
    %c0_i32_1 = arith.constant 0 : i32
    return %c0_i32, %c0_i32_0 : i32, i32
  }
  func.func @transform_6(%arg0: i32) -> (i32, i32) {
    %c0_i32 = arith.constant 0 : i32
    %c0_i32_0 = arith.constant 0 : i32
    %c0_i32_1 = arith.constant 0 : i32
    return %c0_i32, %c0_i32_0 : i32, i32
  }
  func.func @transform_7(%arg0: i32) -> (i32, i32) {
    %c0_i32 = arith.constant 0 : i32
    %c0_i32_0 = arith.constant 0 : i32
    %c0_i32_1 = arith.constant 0 : i32
    return %c0_i32, %c0_i32_0 : i32, i32
  }
  func.func @transform_8(%arg0: i32) -> (i32, i32) {
    %c0_i32 = arith.constant 0 : i32
    %c0_i32_0 = arith.constant 0 : i32
    %c0_i32_1 = arith.constant 0 : i32
    return %c0_i32, %c0_i32_0 : i32, i32
  }
}

</mosaic_0001>

<llo_original>
// kernel: tpu_custom_call.1
$region0: #{tpu_custom_call.1}
  #allocation0 [shape = 'u32[]', space=smem, size = 0x4, offset = 0x4, fixed_abs, tag = 'smem constant byte address 0x4 - core index']
  #allocation1 [shape = 'u32[144,128]{1,0:T(1,128)}', space=vmem, size = 0x12000, scoped, tag = 'internal scratch']
  #allocation2 [shape = 'f32[16,96]{1,0:T(8,128)}', space=vmem, size = 0x2000, scoped, tag = 'scratch operand']
  %s0 = inlined_call_operand.vmem [shape: f32[16,4], index: 0, kind: input, shape index: {}]
  %s1 = inlined_call_operand.vmem [shape: f32[4,96], index: 1, kind: input, shape index: {}]
  %s2 = inlined_call_operand.vmem [shape: f32[32,96], index: 2, kind: input, shape index: {}]
  %s3 = inlined_call_operand.vmem [shape: f32[1,96], index: 3, kind: input, shape index: {}]
  %s4 = inlined_call_operand.vmem [shape: f32[1,96], index: 4, kind: input, shape index: {}]
  %s5 = inlined_call_operand.vmem [shape: f32[32,8], index: 5, kind: input, shape index: {}]
  %s6 = inlined_call_operand.vmem [shape: f32[1,8], index: 6, kind: input, shape index: {}]
  %s7 = inlined_call_operand.vmem [shape: f32[16,8], index: 7, kind: output, shape index: {0}]
  %s8 = inlined_call_operand.hbm [shape: f32[16,32], index: 8, kind: output, shape index: {1}]
  %9 = xla_tuple %s7, %s8
  %s10 = sld [smem:[#allocation0]]
  $region46: #{tpu_custom_call.1} parent=0
    _
  %s12 = ssub.s32 1, %s10
  %s13 = scalar_select 0, %s12, %s10
  $region1: #{tpu_custom_call.1} parent=0
    #allocation3 [shape = 'u8[8192]{0}', space=vmem, size = 0x2000, scoped, tag = 'output window, operand 1, single buffered']
    #allocation4 [shape = 's32[1]{0}', space=sflag, size = 0x4, scoped, tag = 'scoped memory for tpu_custom_call.1']
    %14 = vsyncpa [#allocation4], 0
    // Predicated region
    $region2: #{tpu_custom_call.1} parent=1 // pred_check
      _
    $region3: #{tpu_custom_call.1} parent=1 // pred_check_branch
      %16 = sbr.rel (0) target = $region5
    $region4: #{tpu_custom_call.1} parent=1 // pred_region
      _
    $region5: #{tpu_custom_call.1} parent=1 // pred_fallthru
      _
    // Predicated region
    $region6: #{tpu_custom_call.1} parent=1 // pred_check
      _
    $region7: #{tpu_custom_call.1} parent=1 // pred_check_branch
      %18 = sbr.rel (0) target = $region9
    $region8: #{tpu_custom_call.1} parent=1 // pred_region
      _
    $region9: #{tpu_custom_call.1} parent=1 // pred_fallthru
      _
    // Predicated region
    $region10: #{tpu_custom_call.1} parent=1 // pred_check
      _
    $region11: #{tpu_custom_call.1} parent=1 // pred_check_branch
      %20 = sbr.rel (0) target = $region13
    $region12: #{tpu_custom_call.1} parent=1 // pred_region
      _
    $region13: #{tpu_custom_call.1} parent=1 // pred_fallthru
      _
    // Predicated region
    $region14: #{tpu_custom_call.1} parent=1 // pred_check
      _
    $region15: #{tpu_custom_call.1} parent=1 // pred_check_branch
      %22 = sbr.rel (0) target = $region17
    $region16: #{tpu_custom_call.1} parent=1 // pred_region
      _
    $region17: #{tpu_custom_call.1} parent=1 // pred_fallthru
      _
    // Predicated region
    $region18: #{tpu_custom_call.1} parent=1 // pred_check
      _
    $region19: #{tpu_custom_call.1} parent=1 // pred_check_branch
      %24 = sbr.rel (0) target = $region21
    $region20: #{tpu_custom_call.1} parent=1 // pred_region
      _
    $region21: #{tpu_custom_call.1} parent=1 // pred_fallthru
      _
    // Predicated region
    $region22: #{tpu_custom_call.1} parent=1 // pred_check
      _
    $region23: #{tpu_custom_call.1} parent=1 // pred_check_branch
      %26 = sbr.rel (0) target = $region25
    $region24: #{tpu_custom_call.1} parent=1 // pred_region
      _
    $region25: #{tpu_custom_call.1} parent=1 // pred_fallthru
      _
    // Predicated region
    $region26: #{tpu_custom_call.1} parent=1 // pred_check
      _
    $region27: #{tpu_custom_call.1} parent=1 // pred_check_branch
      %28 = sbr.rel (0) target = $region29
    $region28: #{tpu_custom_call.1} parent=1 // pred_region
      _
    $region29: #{tpu_custom_call.1} parent=1 // pred_fallthru
      _
    %v29 = vld [vmem:[%s0] sm:$0xff]
    %v30 = vld [vmem:[%s0 + $0x8] sm:$0xff]
    %v31 = vld [vmem:[%s1] sm:$0xf]
    %v32 = vld [vmem:[%s3] sm:$0x1]
    %v34 = vlaneseq
    %v35 = vshrl.u32 %v34, 7
    %v36 = vsub.s32 0, %v35
    %v37 = vrot.slane %v32, %v36
    %vm39 = vcmask 31744
    %v41 = vsel %vm39, %v29, 0
    %v44 = vsel %vm39, %v30, 0
    %vm46 = vcmask 1043456
    %v48 = vsel %vm46, %v31, 0
    %50 = vmatprep.subr.mxu0 0.0
    %51 = vmatpush1.msra.mxu0 0.0
    %52 = vmatprep.subr.mxu0 0.0
    %53 = vmatpush1.msra.mxu0 0.0
    %54 = vmatprep.subr.mxu0 0.0
    %55 = vmatpush1.msra.mxu0 0.0
    %56 = vmatprep.subr.mxu0 0.0
    %57 = vmatpush1.msra.mxu0 0.0
    %58 = vmatprep.subr.mxu0 0.0
    %59 = vmatpush1.msra.mxu0 0.0
    %60 = vmatprep.subr.mxu0 0.0
    %61 = vmatpush1.msra.mxu0 0.0
    %62 = vmatprep.subr.mxu0 0.0
    %63 = vmatpush1.msra.mxu0 0.0
    %64 = vmatprep.subr.mxu0 0.0
    %65 = vmatpush1.msra.mxu0 0.0
    %66 = vmatprep.subr.mxu0 0.0
    %67 = vmatpush1.msra.mxu0 0.0
    %68 = vmatprep.subr.mxu0 0.0
    %69 = vmatpush1.msra.mxu0 0.0
    %70 = vmatprep.subr.mxu0 0.0
    %71 = vmatpush1.msra.mxu0 0.0
    %72 = vmatprep.subr.mxu0 0.0
    %73 = vmatpush1.msra.mxu0 0.0
    %74 = vmatprep.subr.mxu0 0.0
    %75 = vmatpush1.msra.mxu0 0.0
    %76 = vmatprep.subr.mxu0 0.0
    %77 = vmatpush1.msra.mxu0 0.0
    %78 = vmatprep.subr.mxu0 0.0
    %79 = vmatpush1.msra.mxu0 0.0
    %80 = vmatprep.subr.mxu0 0.0
    %81 = vmatpush1.msra.mxu0 %v48
    %82 = vmatprep.subr.mxu0 0.0
    %83 = vmatpush2.msra.mxu0 0.0
    %84 = vmatprep.subr.mxu0 0.0
    %85 = vmatpush2.msra.mxu0 0.0
    %86 = vmatprep.subr.mxu0 0.0
    %87 = vmatpush2.msra.mxu0 0.0
    %88 = vmatprep.subr.mxu0 0.0
    %89 = vmatpush2.msra.mxu0 0.0
    %90 = vmatprep.subr.mxu0 0.0
    %91 = vmatpush2.msra.mxu0 0.0
    %92 = vmatprep.subr.mxu0 0.0
    %93 = vmatpush2.msra.mxu0 0.0
    %94 = vmatprep.subr.mxu0 0.0
    %95 = vmatpush2.msra.mxu0 0.0
    %96 = vmatprep.subr.mxu0 0.0
    %97 = vmatpush2.msra.mxu0 0.0
    %98 = vmatprep.subr.mxu0 0.0
    %99 = vmatpush2.msra.mxu0 0.0
    %100 = vmatprep.subr.mxu0 0.0
    %101 = vmatpush2.msra.mxu0 0.0
    %102 = vmatprep.subr.mxu0 0.0
    %103 = vmatpush2.msra.mxu0 0.0
    %104 = vmatprep.subr.mxu0 0.0
    %105 = vmatpush2.msra.mxu0 0.0
    %106 = vmatprep.subr.mxu0 0.0
    %107 = vmatpush2.msra.mxu0 0.0
    %108 = vmatprep.subr.mxu0 0.0
    %109 = vmatpush2.msra.mxu0 0.0
    %110 = vmatprep.subr.mxu0 0.0
    %111 = vmatpush2.msra.mxu0 0.0
    %112 = vmatprep.subr.mxu0 0.0
    %113 = vmatpush2.msra.mxu0 0.0
    %114 = vmatprep.mubr.f32.mxu0 0.0
    %115 = vmatmul.mubr.f32.gmra.mxu0 %v41
    %v116 = vpop.f32.mrf.mxu0
    %v117 = vadd.f32 %v37, %v116
    %v118 = vpop.f32.mrf.mxu0
    %119 = vmatprep.mubr.f32.mxu0 0.0
    %120 = vmatmul.mubr.f32.gmra.mxu0 %v44
    %v121 = vpop.f32.mrf.mxu0
    %v122 = vadd.f32 %v37, %v121
    %v123 = vpop.f32.mrf.mxu0
    %124 = vdwg.mxu0
    %vm125 = vcmask 785408
    %126 = vst.msk [vmem:[#allocation2] sm:$0xff] %vm125, %v117
    %127 = vst.msk [vmem:[#allocation2 + $0x8] sm:$0xff] %vm125, %v122
    %v128 = vld [vmem:[%s2] sm:$0xff]
    %v129 = vld [vmem:[%s2 + $0x8] sm:$0xff]
    %v130 = vld [vmem:[%s2 + $0x10] sm:$0xff]
    %v131 = vld [vmem:[%s2 + $0x18] sm:$0xff]
    %v132 = vld [vmem:[%s4] sm:$0x1]
    %v133 = vld [vmem:[#allocation2] sm:$0x3]
    %v135 = vlaneseq
    %v136 = vshrl.u32 %v135, 7
    %v137 = vsub.s32 0, %v136
    %v138 = vrot.slane %v132, %v137
    %vm140 = vcmask 261120
    %v142 = vsel %vm140, 0.0, 0
    %144 = vmatprep.subr.mxu0 0.0
    %145 = vmatpush1.msra.mxu0 0.0
    %146 = vmatprep.subr.mxu0 0.0
    %147 = vmatpush1.msra.mxu0 0.0
    %148 = vmatprep.subr.mxu0 0.0
    %149 = vmatpush1.msra.mxu0 0.0
    %150 = vmatprep.subr.mxu0 0.0
    %151 = vmatpush1.msra.mxu0 0.0
    %152 = vmatprep.subr.mxu0 0.0
    %153 = vmatpush1.msra.mxu0 0.0
    %154 = vmatprep.subr.mxu0 0.0
    %155 = vmatpush1.msra.mxu0 0.0
    %156 = vmatprep.subr.mxu0 0.0
    %157 = vmatpush1.msra.mxu0 0.0
    %158 = vmatprep.subr.mxu0 0.0
    %159 = vmatpush1.msra.mxu0 0.0
    %160 = vmatprep.subr.mxu0 0.0
    %161 = vmatpush1.msra.mxu0 0.0
    %162 = vmatprep.subr.mxu0 0.0
    %163 = vmatpush1.msra.mxu0 0.0
    %164 = vmatprep.subr.mxu0 0.0
    %165 = vmatpush1.msra.mxu0 0.0
    %166 = vmatprep.subr.mxu0 0.0
    %167 = vmatpush1.msra.mxu0 0.0
    %168 = vmatprep.subr.mxu0 0.0
    %169 = vmatpush1.msra.mxu0 %v131
    %170 = vmatprep.subr.mxu0 0.0
    %171 = vmatpush1.msra.mxu0 %v130
    %172 = vmatprep.subr.mxu0 0.0
    %173 = vmatpush1.msra.mxu0 %v129
    %174 = vmatprep.subr.mxu0 0.0
    %175 = vmatpush1.msra.mxu0 %v128
    %176 = vmatprep.subr.mxu0 0.0
    %177 = vmatpush2.msra.mxu0 0.0
    %178 = vmatprep.subr.mxu0 0.0
    %179 = vmatpush2.msra.mxu0 0.0
    %180 = vmatprep.subr.mxu0 0.0
    %181 = vmatpush2.msra.mxu0 0.0
    %182 = vmatprep.subr.mxu0 0.0
    %183 = vmatpush2.msra.mxu0 0.0
    %184 = vmatprep.subr.mxu0 0.0
    %185 = vmatpush2.msra.mxu0 0.0
    %186 = vmatprep.subr.mxu0 0.0
    %187 = vmatpush2.msra.mxu0 0.0
    %188 = vmatprep.subr.mxu0 0.0
    %189 = vmatpush2.msra.mxu0 0.0
    %190 = vmatprep.subr.mxu0 0.0
    %191 = vmatpush2.msra.mxu0 0.0
    %192 = vmatprep.subr.mxu0 0.0
    %193 = vmatpush2.msra.mxu0 0.0
    %194 = vmatprep.subr.mxu0 0.0
    %195 = vmatpush2.msra.mxu0 0.0
    %196 = vmatprep.subr.mxu0 0.0
    %197 = vmatpush2.msra.mxu0 0.0
    %198 = vmatprep.subr.mxu0 0.0
    %199 = vmatpush2.msra.mxu0 0.0
    %200 = vmatprep.subr.mxu0 0.0
    %201 = vmatpush2.msra.mxu0 0.0
    %202 = vmatprep.subr.mxu0 0.0
    %203 = vmatpush2.msra.mxu0 0.0
    %204 = vmatprep.subr.mxu0 0.0
    %205 = vmatpush2.msra.mxu0 0.0
    %206 = vmatprep.subr.mxu0 0.0
    %207 = vmatpush2.msra.mxu0 0.0
    %208 = vmatprep.mubr.f32.mxu0 0.0
    %209 = vmatmul.mubr.f32.gmra.mxu0 %v142
    %v210 = vpop.f32.mrf.mxu0
    %v211 = vadd.f32 %v138, %v210
    %v212 = vpop.f32.mrf.mxu0
    %213 = vdwg.mxu0
    %v214 = vadd.f32 %v133, %v211
    %v215 = vxor.u32 %v214, 2147483648
    %v216 = vmul.f32 %v215, 1.442695
    %v217 = vpow.pop %v216
    %v218 = vadd.f32 %v217, 1.0
    %v219 = vrcp.pop %v218
    %v220 = vmul.f32 1.0, %v219
    %222 = vrot.lane.b32.xlu0 %v211, 64
    %v223 = vpop.permute.xlu0 %222
    %v225 = vmul.f32 %v220, %v223
    %227 = vrot.lane.b32.xlu0 %v225, 64
    %v228 = vpop.permute.xlu0 %227
    %v230 = vadd.f32 %v133, %v228
    %v231 = vtanh.pop %v230
    %v232 = vsub.f32 1.0, %v220
    %234 = vrot.lane.b32.xlu0 %v231, 96
    %v235 = vpop.permute.xlu0 %234
    %v237 = vmul.f32 %v232, %v235
    %v238 = vmul.f32 %v220, 0.0
    %v239 = vadd.f32 %v237, %v238
    %241 = vrot.lane.b32.xlu0 %v239, 96
    %v242 = vpop.permute.xlu0 %241
    %vm244 = vcmask 254976
    %245 = vst.msk [vmem:[#allocation3] sm:$0x3] %vm244, %v242
    %v246 = vld [vmem:[#allocation2 + $0x2] sm:$0x3]
    %v247 = vsel %vm140, %v242, 0
    %249 = vmatprep.subr.mxu0 0.0
    %250 = vmatpush1.msra.mxu0 0.0
    %251 = vmatprep.subr.mxu0 0.0
    %252 = vmatpush1.msra.mxu0 0.0
    %253 = vmatprep.subr.mxu0 0.0
    %254 = vmatpush1.msra.mxu0 0.0
    %255 = vmatprep.subr.mxu0 0.0
    %256 = vmatpush1.msra.mxu0 0.0
    %257 = vmatprep.subr.mxu0 0.0
    %258 = vmatpush1.msra.mxu0 0.0
    %259 = vmatprep.subr.mxu0 0.0
    %260 = vmatpush1.msra.mxu0 0.0
    %261 = vmatprep.subr.mxu0 0.0
    %262 = vmatpush1.msra.mxu0 0.0
    %263 = vmatprep.subr.mxu0 0.0
    %264 = vmatpush1.msra.mxu0 0.0
    %265 = vmatprep.subr.mxu0 0.0
    %266 = vmatpush1.msra.mxu0 0.0
    %267 = vmatprep.subr.mxu0 0.0
    %268 = vmatpush1.msra.mxu0 0.0
    %269 = vmatprep.subr.mxu0 0.0
    %270 = vmatpush1.msra.mxu0 0.0
    %271 = vmatprep.subr.mxu0 0.0
    %272 = vmatpush1.msra.mxu0 0.0
    %273 = vmatprep.subr.mxu0 0.0
    %274 = vmatpush1.msra.mxu0 %v131
    %275 = vmatprep.subr.mxu0 0.0
    %276 = vmatpush1.msra.mxu0 %v130
    %277 = vmatprep.subr.mxu0 0.0
    %278 = vmatpush1.msra.mxu0 %v129
    %279 = vmatprep.subr.mxu0 0.0
    %280 = vmatpush1.msra.mxu0 %v128
    %281 = vmatprep.subr.mxu0 0.0
    %282 = vmatpush2.msra.mxu0 0.0
    %283 = vmatprep.subr.mxu0 0.0
    %284 = vmatpush2.msra.mxu0 0.0
    %285 = vmatprep.subr.mxu0 0.0
    %286 = vmatpush2.msra.mxu0 0.0
    %287 = vmatprep.subr.mxu0 0.0
    %288 = vmatpush2.msra.mxu0 0.0
    %289 = vmatprep.subr.mxu0 0.0
    %290 = vmatpush2.msra.mxu0 0.0
    %291 = vmatprep.subr.mxu0 0.0
    %292 = vmatpush2.msra.mxu0 0.0
    %293 = vmatprep.subr.mxu0 0.0
    %294 = vmatpush2.msra.mxu0 0.0
    %295 = vmatprep.subr.mxu0 0.0
    %296 = vmatpush2.msra.mxu0 0.0
    %297 = vmatprep.subr.mxu0 0.0
    %298 = vmatpush2.msra.mxu0 0.0
    %299 = vmatprep.subr.mxu0 0.0
    %300 = vmatpush2.msra.mxu0 0.0
    %301 = vmatprep.subr.mxu0 0.0
    %302 = vmatpush2.msra.mxu0 0.0
    %303 = vmatprep.subr.mxu0 0.0
    %304 = vmatpush2.msra.mxu0 0.0
    %305 = vmatprep.subr.mxu0 0.0
    %306 = vmatpush2.msra.mxu0 0.0
    %307 = vmatprep.subr.mxu0 0.0
    %308 = vmatpush2.msra.mxu0 0.0
    %309 = vmatprep.subr.mxu0 0.0
    %310 = vmatpush2.msra.mxu0 0.0
    %311 = vmatprep.subr.mxu0 0.0
    %312 = vmatpush2.msra.mxu0 0.0
    %313 = vmatprep.mubr.f32.mxu0 0.0
    %314 = vmatmul.mubr.f32.gmra.mxu0 %v247
    %v315 = vpop.f32.mrf.mxu0
    %v316 = vadd.f32 %v138, %v315
    %v317 = vpop.f32.mrf.mxu0
    %318 = vdwg.mxu0
    %v319 = vadd.f32 %v246, %v316
    %v320 = vxor.u32 %v319, 2147483648
    %v321 = vmul.f32 %v320, 1.442695
    %v322 = vpow.pop %v321
    %v323 = vadd.f32 %v322, 1.0
    %v324 = vrcp.pop %v323
    %v325 = vmul.f32 1.0, %v324
    %327 = vrot.lane.b32.xlu0 %v316, 64
    %v328 = vpop.permute.xlu0 %327
    %v330 = vmul.f32 %v325, %v328
    %332 = vrot.lane.b32.xlu0 %v330, 64
    %v333 = vpop.permute.xlu0 %332
    %v335 = vadd.f32 %v246, %v333
    %v336 = vtanh.pop %v335
    %v337 = vsub.f32 1.0, %v325
    %339 = vrot.lane.b32.xlu0 %v336, 96
    %v340 = vpop.permute.xlu0 %339
    %v342 = vmul.f32 %v337, %v340
    %v343 = vmul.f32 %v325, %v239
    %v344 = vadd.f32 %v342, %v343
    %346 = vrot.lane.b32.xlu0 %v344, 96
    %v347 = vpop.permute.xlu0 %346
    %349 = vst.msk [vmem:[#allocation3 + $0x2] sm:$0x3] %vm244, %v347
    %v350 = vld [vmem:[#allocation2 + $0x4] sm:$0x3]
    %v351 = vsel %vm140, %v347, 0
    %353 = vmatprep.subr.mxu0 0.0
    %354 = vmatpush1.msra.mxu0 0.0
    %355 = vmatprep.subr.mxu0 0.0
    %356 = vmatpush1.msra.mxu0 0.0
    %357 = vmatprep.subr.mxu0 0.0
    %358 = vmatpush1.msra.mxu0 0.0
    %359 = vmatprep.subr.mxu0 0.0
    %360 = vmatpush1.msra.mxu0 0.0
    %361 = vmatprep.subr.mxu0 0.0
    %362 = vmatpush1.msra.mxu0 0.0
    %363 = vmatprep.subr.mxu0 0.0
    %364 = vmatpush1.msra.mxu0 0.0
    %365 = vmatprep.subr.mxu0 0.0
    %366 = vmatpush1.msra.mxu0 0.0
    %367 = vmatprep.subr.mxu0 0.0
    %368 = vmatpush1.msra.mxu0 0.0
    %369 = vmatprep.subr.mxu0 0.0
    %370 = vmatpush1.msra.mxu0 0.0
    %371 = vmatprep.subr.mxu0 0.0
    %372 = vmatpush1.msra.mxu0 0.0
    %373 = vmatprep.subr.mxu0 0.0
    %374 = vmatpush1.msra.mxu0 0.0
    %375 = vmatprep.subr.mxu0 0.0
    %376 = vmatpush1.msra.mxu0 0.0
    %377 = vmatprep.subr.mxu0 0.0
    %378 = vmatpush1.msra.mxu0 %v131
    %379 = vmatprep.subr.mxu0 0.0
    %380 = vmatpush1.msra.mxu0 %v130
    %381 = vmatprep.subr.mxu0 0.0
    %382 = vmatpush1.msra.mxu0 %v129
    %383 = vmatprep.subr.mxu0 0.0
    %384 = vmatpush1.msra.mxu0 %v128
    %385 = vmatprep.subr.mxu0 0.0
    %386 = vmatpush2.msra.mxu0 0.0
    %387 = vmatprep.subr.mxu0 0.0
    %388 = vmatpush2.msra.mxu0 0.0
    %389 = vmatprep.subr.mxu0 0.0
    %390 = vmatpush2.msra.mxu0 0.0
    %391 = vmatprep.subr.mxu0 0.0
    %392 = vmatpush2.msra.mxu0 0.0
    %393 = vmatprep.subr.mxu0 0.0
    %394 = vmatpush2.msra.mxu0 0.0
    %395 = vmatprep.subr.mxu0 0.0
    %396 = vmatpush2.msra.mxu0 0.0
    %397 = vmatprep.subr.mxu0 0.0
    %398 = vmatpush2.msra.mxu0 0.0
    %399 = vmatprep.subr.mxu0 0.0
    %400 = vmatpush2.msra.mxu0 0.0
    %401 = vmatprep.subr.mxu0 0.0
    %402 = vmatpush2.msra.mxu0 0.0
    %403 = vmatprep.subr.mxu0 0.0
    %404 = vmatpush2.msra.mxu0 0.0
    %405 = vmatprep.subr.mxu0 0.0
    %406 = vmatpush2.msra.mxu0 0.0
    %407 = vmatprep.subr.mxu0 0.0
    %408 = vmatpush2.msra.mxu0 0.0
    %409 = vmatprep.subr.mxu0 0.0
    %410 = vmatpush2.msra.mxu0 0.0
    %411 = vmatprep.subr.mxu0 0.0
    %412 = vmatpush2.msra.mxu0 0.0
    %413 = vmatprep.subr.mxu0 0.0
    %414 = vmatpush2.msra.mxu0 0.0
    %415 = vmatprep.subr.mxu0 0.0
    %416 = vmatpush2.msra.mxu0 0.0
    %417 = vmatprep.mubr.f32.mxu0 0.0
    %418 = vmatmul.mubr.f32.gmra.mxu0 %v351
    %v419 = vpop.f32.mrf.mxu0
    %v420 = vadd.f32 %v138, %v419
    %v421 = vpop.f32.mrf.mxu0
    %422 = vdwg.mxu0
    %v423 = vadd.f32 %v350, %v420
    %v424 = vxor.u32 %v423, 2147483648
    %v425 = vmul.f32 %v424, 1.442695
    %v426 = vpow.pop %v425
    %v427 = vadd.f32 %v426, 1.0
    %v428 = vrcp.pop %v427
    %v429 = vmul.f32 1.0, %v428
    %431 = vrot.lane.b32.xlu0 %v420, 64
    %v432 = vpop.permute.xlu0 %431
    %v434 = vmul.f32 %v429, %v432
    %436 = vrot.lane.b32.xlu0 %v434, 64
    %v437 = vpop.permute.xlu0 %436
    %v439 = vadd.f32 %v350, %v437
    %v440 = vtanh.pop %v439
    %v441 = vsub.f32 1.0, %v429
    %443 = vrot.lane.b32.xlu0 %v440, 96
    %v444 = vpop.permute.xlu0 %443
    %v446 = vmul.f32 %v441, %v444
    %v447 = vmul.f32 %v429, %v344
    %v448 = vadd.f32 %v446, %v447
    %450 = vrot.lane.b32.xlu0 %v448, 96
    %v451 = vpop.permute.xlu0 %450
    %453 = vst.msk [vmem:[#allocation3 + $0x4] sm:$0x3] %vm244, %v451
    %v454 = vld [vmem:[#allocation2 + $0x6] sm:$0x3]
    %v455 = vsel %vm140, %v451, 0
    %457 = vmatprep.subr.mxu0 0.0
    %458 = vmatpush1.msra.mxu0 0.0
    %459 = vmatprep.subr.mxu0 0.0
    %460 = vmatpush1.msra.mxu0 0.0
    %461 = vmatprep.subr.mxu0 0.0
    %462 = vmatpush1.msra.mxu0 0.0
    %463 = vmatprep.subr.mxu0 0.0
    %464 = vmatpush1.msra.mxu0 0.0
    %465 = vmatprep.subr.mxu0 0.0
    %466 = vmatpush1.msra.mxu0 0.0
    %467 = vmatprep.subr.mxu0 0.0
    %468 = vmatpush1.msra.mxu0 0.0
    %469 = vmatprep.subr.mxu0 0.0
    %470 = vmatpush1.msra.mxu0 0.0
    %471 = vmatprep.subr.mxu0 0.0
    %472 = vmatpush1.msra.mxu0 0.0
    %473 = vmatprep.subr.mxu0 0.0
    %474 = vmatpush1.msra.mxu0 0.0
    %475 = vmatprep.subr.mxu0 0.0
    %476 = vmatpush1.msra.mxu0 0.0
    %477 = vmatprep.subr.mxu0 0.0
    %478 = vmatpush1.msra.mxu0 0.0
    %479 = vmatprep.subr.mxu0 0.0
    %480 = vmatpush1.msra.mxu0 0.0
    %481 = vmatprep.subr.mxu0 0.0
    %482 = vmatpush1.msra.mxu0 %v131
    %483 = vmatprep.subr.mxu0 0.0
    %484 = vmatpush1.msra.mxu0 %v130
    %485 = vmatprep.subr.mxu0 0.0
    %486 = vmatpush1.msra.mxu0 %v129
    %487 = vmatprep.subr.mxu0 0.0
    %488 = vmatpush1.msra.mxu0 %v128
    %489 = vmatprep.subr.mxu0 0.0
    %490 = vmatpush2.msra.mxu0 0.0
    %491 = vmatprep.subr.mxu0 0.0
    %492 = vmatpush2.msra.mxu0 0.0
    %493 = vmatprep.subr.mxu0 0.0
    %494 = vmatpush2.msra.mxu0 0.0
    %495 = vmatprep.subr.mxu0 0.0
    %496 = vmatpush2.msra.mxu0 0.0
    %497 = vmatprep.subr.mxu0 0.0
    %498 = vmatpush2.msra.mxu0 0.0
    %499 = vmatprep.subr.mxu0 0.0
    %500 = vmatpush2.msra.mxu0 0.0
    %501 = vmatprep.subr.mxu0 0.0
    %502 = vmatpush2.msra.mxu0 0.0
    %503 = vmatprep.subr.mxu0 0.0
    %504 = vmatpush2.msra.mxu0 0.0
    %505 = vmatprep.subr.mxu0 0.0
    %506 = vmatpush2.msra.mxu0 0.0
    %507 = vmatprep.subr.mxu0 0.0
    %508 = vmatpush2.msra.mxu0 0.0
    %509 = vmatprep.subr.mxu0 0.0
    %510 = vmatpush2.msra.mxu0 0.0
    %511 = vmatprep.subr.mxu0 0.0
    %512 = vmatpush2.msra.mxu0 0.0
    %513 = vmatprep.subr.mxu0 0.0
    %514 = vmatpush2.msra.mxu0 0.0
    %515 = vmatprep.subr.mxu0 0.0
    %516 = vmatpush2.msra.mxu0 0.0
    %517 = vmatprep.subr.mxu0 0.0
    %518 = vmatpush2.msra.mxu0 0.0
    %519 = vmatprep.subr.mxu0 0.0
    %520 = vmatpush2.msra.mxu0 0.0
    %521 = vmatprep.mubr.f32.mxu0 0.0
    %522 = vmatmul.mubr.f32.gmra.mxu0 %v455
    %v523 = vpop.f32.mrf.mxu0
    %v524 = vadd.f32 %v138, %v523
    %v525 = vpop.f32.mrf.mxu0
    %526 = vdwg.mxu0
    %v527 = vadd.f32 %v454, %v524
    %v528 = vxor.u32 %v527, 2147483648
    %v529 = vmul.f32 %v528, 1.442695
    %v530 = vpow.pop %v529
    %v531 = vadd.f32 %v530, 1.0
    %v532 = vrcp.pop %v531
    %v533 = vmul.f32 1.0, %v532
    %535 = vrot.lane.b32.xlu0 %v524, 64
    %v536 = vpop.permute.xlu0 %535
    %v538 = vmul.f32 %v533, %v536
    %540 = vrot.lane.b32.xlu0 %v538, 64
    %v541 = vpop.permute.xlu0 %540
    %v543 = vadd.f32 %v454, %v541
    %v544 = vtanh.pop %v543
    %v545 = vsub.f32 1.0, %v533
    %547 = vrot.lane.b32.xlu0 %v544, 96
    %v548 = vpop.permute.xlu0 %547
    %v550 = vmul.f32 %v545, %v548
    %v551 = vmul.f32 %v533, %v448
    %v552 = vadd.f32 %v550, %v551
    %554 = vrot.lane.b32.xlu0 %v552, 96
    %v555 = vpop.permute.xlu0 %554
    %557 = vst.msk [vmem:[#allocation3 + $0x6] sm:$0x3] %vm244, %v555
    %v558 = vld [vmem:[#allocation2 + $0x8] sm:$0x3]
    %v559 = vsel %vm140, %v555, 0
    %561 = vmatprep.subr.mxu0 0.0
    %562 = vmatpush1.msra.mxu0 0.0
    %563 = vmatprep.subr.mxu0 0.0
    %564 = vmatpush1.msra.mxu0 0.0
    %565 = vmatprep.subr.mxu0 0.0
    %566 = vmatpush1.msra.mxu0 0.0
    %567 = vmatprep.subr.mxu0 0.0
    %568 = vmatpush1.msra.mxu0 0.0
    %569 = vmatprep.subr.mxu0 0.0
    %570 = vmatpush1.msra.mxu0 0.0
    %571 = vmatprep.subr.mxu0 0.0
    %572 = vmatpush1.msra.mxu0 0.0
    %573 = vmatprep.subr.mxu0 0.0
    %574 = vmatpush1.msra.mxu0 0.0
    %575 = vmatprep.subr.mxu0 0.0
    %576 = vmatpush1.msra.mxu0 0.0
    %577 = vmatprep.subr.mxu0 0.0
    %578 = vmatpush1.msra.mxu0 0.0
    %579 = vmatprep.subr.mxu0 0.0
    %580 = vmatpush1.msra.mxu0 0.0
    %581 = vmatprep.subr.mxu0 0.0
    %582 = vmatpush1.msra.mxu0 0.0
    %583 = vmatprep.subr.mxu0 0.0
    %584 = vmatpush1.msra.mxu0 0.0
    %585 = vmatprep.subr.mxu0 0.0
    %586 = vmatpush1.msra.mxu0 %v131
    %587 = vmatprep.subr.mxu0 0.0
    %588 = vmatpush1.msra.mxu0 %v130
    %589 = vmatprep.subr.mxu0 0.0
    %590 = vmatpush1.msra.mxu0 %v129
    %591 = vmatprep.subr.mxu0 0.0
    %592 = vmatpush1.msra.mxu0 %v128
    %593 = vmatprep.subr.mxu0 0.0
    %594 = vmatpush2.msra.mxu0 0.0
    %595 = vmatprep.subr.mxu0 0.0
    %596 = vmatpush2.msra.mxu0 0.0
    %597 = vmatprep.subr.mxu0 0.0
    %598 = vmatpush2.msra.mxu0 0.0
    %599 = vmatprep.subr.mxu0 0.0
    %600 = vmatpush2.msra.mxu0 0.0
    %601 = vmatprep.subr.mxu0 0.0
    %602 = vmatpush2.msra.mxu0 0.0
    %603 = vmatprep.subr.mxu0 0.0
    %604 = vmatpush2.msra.mxu0 0.0
    %605 = vmatprep.subr.mxu0 0.0
    %606 = vmatpush2.msra.mxu0 0.0
    %607 = vmatprep.subr.mxu0 0.0
    %608 = vmatpush2.msra.mxu0 0.0
    %609 = vmatprep.subr.mxu0 0.0
    %610 = vmatpush2.msra.mxu0 0.0
    %611 = vmatprep.subr.mxu0 0.0
    %612 = vmatpush2.msra.mxu0 0.0
    %613 = vmatprep.subr.mxu0 0.0
    %614 = vmatpush2.msra.mxu0 0.0
    %615 = vmatprep.subr.mxu0 0.0
    %616 = vmatpush2.msra.mxu0 0.0
    %617 = vmatprep.subr.mxu0 0.0
    %618 = vmatpush2.msra.mxu0 0.0
    %619 = vmatprep.subr.mxu0 0.0
    %620 = vmatpush2.msra.mxu0 0.0
    %621 = vmatprep.subr.mxu0 0.0
    %622 = vmatpush2.msra.mxu0 0.0
    %623 = vmatprep.subr.mxu0 0.0
    %624 = vmatpush2.msra.mxu0 0.0
    %625 = vmatprep.mubr.f32.mxu0 0.0
    %626 = vmatmul.mubr.f32.gmra.mxu0 %v559
    %v627 = vpop.f32.mrf.mxu0
    %v628 = vadd.f32 %v138, %v627
    %v629 = vpop.f32.mrf.mxu0
    %630 = vdwg.mxu0
    %v631 = vadd.f32 %v558, %v628
    %v632 = vxor.u32 %v631, 2147483648
    %v633 = vmul.f32 %v632, 1.442695
    %v634 = vpow.pop %v633
    %v635 = vadd.f32 %v634, 1.0
    %v636 = vrcp.pop %v635
    %v637 = vmul.f32 1.0, %v636
    %639 = vrot.lane.b32.xlu0 %v628, 64
    %v640 = vpop.permute.xlu0 %639
    %v642 = vmul.f32 %v637, %v640
    %644 = vrot.lane.b32.xlu0 %v642, 64
    %v645 = vpop.permute.xlu0 %644
    %v647 = vadd.f32 %v558, %v645
    %v648 = vtanh.pop %v647
    %v649 = vsub.f32 1.0, %v637
    %651 = vrot.lane.b32.xlu0 %v648, 96
    %v652 = vpop.permute.xlu0 %651
    %v654 = vmul.f32 %v649, %v652
    %v655 = vmul.f32 %v637, %v552
    %v656 = vadd.f32 %v654, %v655
    %658 = vrot.lane.b32.xlu0 %v656, 96
    %v659 = vpop.permute.xlu0 %658
    %661 = vst.msk [vmem:[#allocation3 + $0x8] sm:$0x3] %vm244, %v659
    %v662 = vld [vmem:[#allocation2 + $0xa] sm:$0x3]
    %v663 = vsel %vm140, %v659, 0
    %665 = vmatprep.subr.mxu0 0.0
    %666 = vmatpush1.msra.mxu0 0.0
    %667 = vmatprep.subr.mxu0 0.0
    %668 = vmatpush1.msra.mxu0 0.0
    %669 = vmatprep.subr.mxu0 0.0
    %670 = vmatpush1.msra.mxu0 0.0
    %671 = vmatprep.subr.mxu0 0.0
    %672 = vmatpush1.msra.mxu0 0.0
    %673 = vmatprep.subr.mxu0 0.0
    %674 = vmatpush1.msra.mxu0 0.0
    %675 = vmatprep.subr.mxu0 0.0
    %676 = vmatpush1.msra.mxu0 0.0
    %677 = vmatprep.subr.mxu0 0.0
    %678 = vmatpush1.msra.mxu0 0.0
    %679 = vmatprep.subr.mxu0 0.0
    %680 = vmatpush1.msra.mxu0 0.0
    %681 = vmatprep.subr.mxu0 0.0
    %682 = vmatpush1.msra.mxu0 0.0
    %683 = vmatprep.subr.mxu0 0.0
    %684 = vmatpush1.msra.mxu0 0.0
    %685 = vmatprep.subr.mxu0 0.0
    %686 = vmatpush1.msra.mxu0 0.0
    %687 = vmatprep.subr.mxu0 0.0
    %688 = vmatpush1.msra.mxu0 0.0
    %689 = vmatprep.subr.mxu0 0.0
    %690 = vmatpush1.msra.mxu0 %v131
    %691 = vmatprep.subr.mxu0 0.0
    %692 = vmatpush1.msra.mxu0 %v130
    %693 = vmatprep.subr.mxu0 0.0
    %694 = vmatpush1.msra.mxu0 %v129
    %695 = vmatprep.subr.mxu0 0.0
    %696 = vmatpush1.msra.mxu0 %v128
    %697 = vmatprep.subr.mxu0 0.0
    %698 = vmatpush2.msra.mxu0 0.0
    %699 = vmatprep.subr.mxu0 0.0
    %700 = vmatpush2.msra.mxu0 0.0
    %701 = vmatprep.subr.mxu0 0.0
    %702 = vmatpush2.msra.mxu0 0.0
    %703 = vmatprep.subr.mxu0 0.0
    %704 = vmatpush2.msra.mxu0 0.0
    %705 = vmatprep.subr.mxu0 0.0
    %706 = vmatpush2.msra.mxu0 0.0
    %707 = vmatprep.subr.mxu0 0.0
    %708 = vmatpush2.msra.mxu0 0.0
    %709 = vmatprep.subr.mxu0 0.0
    %710 = vmatpush2.msra.mxu0 0.0
    %711 = vmatprep.subr.mxu0 0.0
    %712 = vmatpush2.msra.mxu0 0.0
    %713 = vmatprep.subr.mxu0 0.0
    %714 = vmatpush2.msra.mxu0 0.0
    %715 = vmatprep.subr.mxu0 0.0
    %716 = vmatpush2.msra.mxu0 0.0
    %717 = vmatprep.subr.mxu0 0.0
    %718 = vmatpush2.msra.mxu0 0.0
    %719 = vmatprep.subr.mxu0 0.0
    %720 = vmatpush2.msra.mxu0 0.0
    %721 = vmatprep.subr.mxu0 0.0
    %722 = vmatpush2.msra.mxu0 0.0
    %723 = vmatprep.subr.mxu0 0.0
    %724 = vmatpush2.msra.mxu0 0.0
    %725 = vmatprep.subr.mxu0 0.0
    %726 = vmatpush2.msra.mxu0 0.0
    %727 = vmatprep.subr.mxu0 0.0
    %728 = vmatpush2.msra.mxu0 0.0
    %729 = vmatprep.mubr.f32.mxu0 0.0
    %730 = vmatmul.mubr.f32.gmra.mxu0 %v663
    %v731 = vpop.f32.mrf.mxu0
    %v732 = vadd.f32 %v138, %v731
    %v733 = vpop.f32.mrf.mxu0
    %734 = vdwg.mxu0
    %v735 = vadd.f32 %v662, %v732
    %v736 = vxor.u32 %v735, 2147483648
    %v737 = vmul.f32 %v736, 1.442695
    %v738 = vpow.pop %v737
    %v739 = vadd.f32 %v738, 1.0
    %v740 = vrcp.pop %v739
    %v741 = vmul.f32 1.0, %v740
    %743 = vrot.lane.b32.xlu0 %v732, 64
    %v744 = vpop.permute.xlu0 %743
    %v746 = vmul.f32 %v741, %v744
    %748 = vrot.lane.b32.xlu0 %v746, 64
    %v749 = vpop.permute.xlu0 %748
    %v751 = vadd.f32 %v662, %v749
    %v752 = vtanh.pop %v751
    %v753 = vsub.f32 1.0, %v741
    %755 = vrot.lane.b32.xlu0 %v752, 96
    %v756 = vpop.permute.xlu0 %755
    %v758 = vmul.f32 %v753, %v756
    %v759 = vmul.f32 %v741, %v656
    %v760 = vadd.f32 %v758, %v759
    %762 = vrot.lane.b32.xlu0 %v760, 96
    %v763 = vpop.permute.xlu0 %762
    %765 = vst.msk [vmem:[#allocation3 + $0xa] sm:$0x3] %vm244, %v763
    %v766 = vld [vmem:[#allocation2 + $0xc] sm:$0x3]
    %v767 = vsel %vm140, %v763, 0
    %769 = vmatprep.subr.mxu0 0.0
    %770 = vmatpush1.msra.mxu0 0.0
    %771 = vmatprep.subr.mxu0 0.0
    %772 = vmatpush1.msra.mxu0 0.0
    %773 = vmatprep.subr.mxu0 0.0
    %774 = vmatpush1.msra.mxu0 0.0
    %775 = vmatprep.subr.mxu0 0.0
    %776 = vmatpush1.msra.mxu0 0.0
    %777 = vmatprep.subr.mxu0 0.0
    %778 = vmatpush1.msra.mxu0 0.0
    %779 = vmatprep.subr.mxu0 0.0
    %780 = vmatpush1.msra.mxu0 0.0
    %781 = vmatprep.subr.mxu0 0.0
    %782 = vmatpush1.msra.mxu0 0.0
    %783 = vmatprep.subr.mxu0 0.0
    %784 = vmatpush1.msra.mxu0 0.0
    %785 = vmatprep.subr.mxu0 0.0
    %786 = vmatpush1.msra.mxu0 0.0
    %787 = vmatprep.subr.mxu0 0.0
    %788 = vmatpush1.msra.mxu0 0.0
    %789 = vmatprep.subr.mxu0 0.0
    %790 = vmatpush1.msra.mxu0 0.0
    %791 = vmatprep.subr.mxu0 0.0
    %792 = vmatpush1.msra.mxu0 0.0
    %793 = vmatprep.subr.mxu0 0.0
    %794 = vmatpush1.msra.mxu0 %v131
    %795 = vmatprep.subr.mxu0 0.0
    %796 = vmatpush1.msra.mxu0 %v130
    %797 = vmatprep.subr.mxu0 0.0
    %798 = vmatpush1.msra.mxu0 %v129
    %799 = vmatprep.subr.mxu0 0.0
    %800 = vmatpush1.msra.mxu0 %v128
    %801 = vmatprep.subr.mxu0 0.0
    %802 = vmatpush2.msra.mxu0 0.0
    %803 = vmatprep.subr.mxu0 0.0
    %804 = vmatpush2.msra.mxu0 0.0
    %805 = vmatprep.subr.mxu0 0.0
    %806 = vmatpush2.msra.mxu0 0.0
    %807 = vmatprep.subr.mxu0 0.0
    %808 = vmatpush2.msra.mxu0 0.0
    %809 = vmatprep.subr.mxu0 0.0
    %810 = vmatpush2.msra.mxu0 0.0
    %811 = vmatprep.subr.mxu0 0.0
    %812 = vmatpush2.msra.mxu0 0.0
    %813 = vmatprep.subr.mxu0 0.0
    %814 = vmatpush2.msra.mxu0 0.0
    %815 = vmatprep.subr.mxu0 0.0
    %816 = vmatpush2.msra.mxu0 0.0
    %817 = vmatprep.subr.mxu0 0.0
    %818 = vmatpush2.msra.mxu0 0.0
    %819 = vmatprep.subr.mxu0 0.0
    %820 = vmatpush2.msra.mxu0 0.0
    %821 = vmatprep.subr.mxu0 0.0
    %822 = vmatpush2.msra.mxu0 0.0
    %823 = vmatprep.subr.mxu0 0.0
    %824 = vmatpush2.msra.mxu0 0.0
    %825 = vmatprep.subr.mxu0 0.0
    %826 = vmatpush2.msra.mxu0 0.0
    %827 = vmatprep.subr.mxu0 0.0
    %828 = vmatpush2.msra.mxu0 0.0
    %829 = vmatprep.subr.mxu0 0.0
    %830 = vmatpush2.msra.mxu0 0.0
    %831 = vmatprep.subr.mxu0 0.0
    %832 = vmatpush2.msra.mxu0 0.0
    %833 = vmatprep.mubr.f32.mxu0 0.0
    %834 = vmatmul.mubr.f32.gmra.mxu0 %v767
    %v835 = vpop.f32.mrf.mxu0
    %v836 = vadd.f32 %v138, %v835
    %v837 = vpop.f32.mrf.mxu0
    %838 = vdwg.mxu0
    %v839 = vadd.f32 %v766, %v836
    %v840 = vxor.u32 %v839, 2147483648
    %v841 = vmul.f32 %v840, 1.442695
    %v842 = vpow.pop %v841
    %v843 = vadd.f32 %v842, 1.0
    %v844 = vrcp.pop %v843
    %v845 = vmul.f32 1.0, %v844
    %847 = vrot.lane.b32.xlu0 %v836, 64
    %v848 = vpop.permute.xlu0 %847
    %v850 = vmul.f32 %v845, %v848
    %852 = vrot.lane.b32.xlu0 %v850, 64
    %v853 = vpop.permute.xlu0 %852
    %v855 = vadd.f32 %v766, %v853
    %v856 = vtanh.pop %v855
    %v857 = vsub.f32 1.0, %v845
    %859 = vrot.lane.b32.xlu0 %v856, 96
    %v860 = vpop.permute.xlu0 %859
    %v862 = vmul.f32 %v857, %v860
    %v863 = vmul.f32 %v845, %v760
    %v864 = vadd.f32 %v862, %v863
    %866 = vrot.lane.b32.xlu0 %v864, 96
    %v867 = vpop.permute.xlu0 %866
    %869 = vst.msk [vmem:[#allocation3 + $0xc] sm:$0x3] %vm244, %v867
    %v870 = vld [vmem:[#allocation2 + $0xe] sm:$0x3]
    %v871 = vsel %vm140, %v867, 0
    %873 = vmatprep.subr.mxu0 0.0
    %874 = vmatpush1.msra.mxu0 0.0
    %875 = vmatprep.subr.mxu0 0.0
    %876 = vmatpush1.msra.mxu0 0.0
    %877 = vmatprep.subr.mxu0 0.0
    %878 = vmatpush1.msra.mxu0 0.0
    %879 = vmatprep.subr.mxu0 0.0
    %880 = vmatpush1.msra.mxu0 0.0
    %881 = vmatprep.subr.mxu0 0.0
    %882 = vmatpush1.msra.mxu0 0.0
    %883 = vmatprep.subr.mxu0 0.0
    %884 = vmatpush1.msra.mxu0 0.0
    %885 = vmatprep.subr.mxu0 0.0
    %886 = vmatpush1.msra.mxu0 0.0
    %887 = vmatprep.subr.mxu0 0.0
    %888 = vmatpush1.msra.mxu0 0.0
    %889 = vmatprep.subr.mxu0 0.0
    %890 = vmatpush1.msra.mxu0 0.0
    %891 = vmatprep.subr.mxu0 0.0
    %892 = vmatpush1.msra.mxu0 0.0
    %893 = vmatprep.subr.mxu0 0.0
    %894 = vmatpush1.msra.mxu0 0.0
    %895 = vmatprep.subr.mxu0 0.0
    %896 = vmatpush1.msra.mxu0 0.0
    %897 = vmatprep.subr.mxu0 0.0
    %898 = vmatpush1.msra.mxu0 %v131
    %899 = vmatprep.subr.mxu0 0.0
    %900 = vmatpush1.msra.mxu0 %v130
    %901 = vmatprep.subr.mxu0 0.0
    %902 = vmatpush1.msra.mxu0 %v129
    %903 = vmatprep.subr.mxu0 0.0
    %904 = vmatpush1.msra.mxu0 %v128
    %905 = vmatprep.subr.mxu0 0.0
    %906 = vmatpush2.msra.mxu0 0.0
    %907 = vmatprep.subr.mxu0 0.0
    %908 = vmatpush2.msra.mxu0 0.0
    %909 = vmatprep.subr.mxu0 0.0
    %910 = vmatpush2.msra.mxu0 0.0
    %911 = vmatprep.subr.mxu0 0.0
    %912 = vmatpush2.msra.mxu0 0.0
    %913 = vmatprep.subr.mxu0 0.0
    %914 = vmatpush2.msra.mxu0 0.0
    %915 = vmatprep.subr.mxu0 0.0
    %916 = vmatpush2.msra.mxu0 0.0
    %917 = vmatprep.subr.mxu0 0.0
    %918 = vmatpush2.msra.mxu0 0.0
    %919 = vmatprep.subr.mxu0 0.0
    %920 = vmatpush2.msra.mxu0 0.0
    %921 = vmatprep.subr.mxu0 0.0
    %922 = vmatpush2.msra.mxu0 0.0
    %923 = vmatprep.subr.mxu0 0.0
    %924 = vmatpush2.msra.mxu0 0.0
    %925 = vmatprep.subr.mxu0 0.0
    %926 = vmatpush2.msra.mxu0 0.0
    %927 = vmatprep.subr.mxu0 0.0
    %928 = vmatpush2.msra.mxu0 0.0
    %929 = vmatprep.subr.mxu0 0.0
    %930 = vmatpush2.msra.mxu0 0.0
    %931 = vmatprep.subr.mxu0 0.0
    %932 = vmatpush2.msra.mxu0 0.0
    %933 = vmatprep.subr.mxu0 0.0
    %934 = vmatpush2.msra.mxu0 0.0
    %935 = vmatprep.subr.mxu0 0.0
    %936 = vmatpush2.msra.mxu0 0.0
    %937 = vmatprep.mubr.f32.mxu0 0.0
    %938 = vmatmul.mubr.f32.gmra.mxu0 %v871
    %v939 = vpop.f32.mrf.mxu0
    %v940 = vadd.f32 %v138, %v939
    %v941 = vpop.f32.mrf.mxu0
    %942 = vdwg.mxu0
    %v943 = vadd.f32 %v870, %v940
    %v944 = vxor.u32 %v943, 2147483648
    %v945 = vmul.f32 %v944, 1.442695
    %v946 = vpow.pop %v945
    %v947 = vadd.f32 %v946, 1.0
    %v948 = vrcp.pop %v947
    %v949 = vmul.f32 1.0, %v948
    %951 = vrot.lane.b32.xlu0 %v940, 64
    %v952 = vpop.permute.xlu0 %951
    %v954 = vmul.f32 %v949, %v952
    %956 = vrot.lane.b32.xlu0 %v954, 64
    %v957 = vpop.permute.xlu0 %956
    %v959 = vadd.f32 %v870, %v957
    %v960 = vtanh.pop %v959
    %v961 = vsub.f32 1.0, %v949
    %963 = vrot.lane.b32.xlu0 %v960, 96
    %v964 = vpop.permute.xlu0 %963
    %v966 = vmul.f32 %v961, %v964
    %v967 = vmul.f32 %v949, %v864
    %v968 = vadd.f32 %v966, %v967
    %970 = vrot.lane.b32.xlu0 %v968, 96
    %v971 = vpop.permute.xlu0 %970
    %973 = vst.msk [vmem:[#allocation3 + $0xe] sm:$0x3] %vm244, %v971
    %v974 = vld [vmem:[#allocation3] sm:$0xff]
    %v975 = vld [vmem:[#allocation3 + $0x8] sm:$0xff]
    %v976 = vld [vmem:[%s5] sm:$0xff]
    %v977 = vld [vmem:[%s5 + $0x8] sm:$0xff]
    %v978 = vld [vmem:[%s5 + $0x10] sm:$0xff]
    %v979 = vld [vmem:[%s5 + $0x18] sm:$0xff]
    %v980 = vld [vmem:[%s6] sm:$0x1]
    %v982 = vlaneseq
    %v983 = vshrl.u32 %v982, 7
    %v984 = vsub.s32 0, %v983
    %v985 = vrot.slane %v980, %v984
    %v988 = vsel %vm140, %v974, 0
    %v991 = vsel %vm140, %v975, 0
    %993 = vmatprep.subr.mxu0 0.0
    %994 = vmatpush1.msra.mxu0 0.0
    %995 = vmatprep.subr.mxu0 0.0
    %996 = vmatpush1.msra.mxu0 0.0
    %997 = vmatprep.subr.mxu0 0.0
    %998 = vmatpush1.msra.mxu0 0.0
    %999 = vmatprep.subr.mxu0 0.0
    %1000 = vmatpush1.msra.mxu0 0.0
    %1001 = vmatprep.subr.mxu0 0.0
    %1002 = vmatpush1.msra.mxu0 0.0
    %1003 = vmatprep.subr.mxu0 0.0
    %1004 = vmatpush1.msra.mxu0 0.0
    %1005 = vmatprep.subr.mxu0 0.0
    %1006 = vmatpush1.msra.mxu0 0.0
    %1007 = vmatprep.subr.mxu0 0.0
    %1008 = vmatpush1.msra.mxu0 0.0
    %1009 = vmatprep.subr.mxu0 0.0
    %1010 = vmatpush1.msra.mxu0 0.0
    %1011 = vmatprep.subr.mxu0 0.0
    %1012 = vmatpush1.msra.mxu0 0.0
    %1013 = vmatprep.subr.mxu0 0.0
    %1014 = vmatpush1.msra.mxu0 0.0
    %1015 = vmatprep.subr.mxu0 0.0
    %1016 = vmatpush1.msra.mxu0 0.0
    %1017 = vmatprep.subr.mxu0 0.0
    %1018 = vmatpush1.msra.mxu0 %v979
    %1019 = vmatprep.subr.mxu0 0.0
    %1020 = vmatpush1.msra.mxu0 %v978
    %1021 = vmatprep.subr.mxu0 0.0
    %1022 = vmatpush1.msra.mxu0 %v977
    %1023 = vmatprep.subr.mxu0 0.0
    %1024 = vmatpush1.msra.mxu0 %v976
    %1025 = vmatprep.subr.mxu0 0.0
    %1026 = vmatpush2.msra.mxu0 0.0
    %1027 = vmatprep.subr.mxu0 0.0
    %1028 = vmatpush2.msra.mxu0 0.0
    %1029 = vmatprep.subr.mxu0 0.0
    %1030 = vmatpush2.msra.mxu0 0.0
    %1031 = vmatprep.subr.mxu0 0.0
    %1032 = vmatpush2.msra.mxu0 0.0
    %1033 = vmatprep.subr.mxu0 0.0
    %1034 = vmatpush2.msra.mxu0 0.0
    %1035 = vmatprep.subr.mxu0 0.0
    %1036 = vmatpush2.msra.mxu0 0.0
    %1037 = vmatprep.subr.mxu0 0.0
    %1038 = vmatpush2.msra.mxu0 0.0
    %1039 = vmatprep.subr.mxu0 0.0
    %1040 = vmatpush2.msra.mxu0 0.0
    %1041 = vmatprep.subr.mxu0 0.0
    %1042 = vmatpush2.msra.mxu0 0.0
    %1043 = vmatprep.subr.mxu0 0.0
    %1044 = vmatpush2.msra.mxu0 0.0
    %1045 = vmatprep.subr.mxu0 0.0
    %1046 = vmatpush2.msra.mxu0 0.0
    %1047 = vmatprep.subr.mxu0 0.0
    %1048 = vmatpush2.msra.mxu0 0.0
    %1049 = vmatprep.subr.mxu0 0.0
    %1050 = vmatpush2.msra.mxu0 0.0
    %1051 = vmatprep.subr.mxu0 0.0
    %1052 = vmatpush2.msra.mxu0 0.0
    %1053 = vmatprep.subr.mxu0 0.0
    %1054 = vmatpush2.msra.mxu0 0.0
    %1055 = vmatprep.subr.mxu0 0.0
    %1056 = vmatpush2.msra.mxu0 0.0
    %1057 = vmatprep.mubr.f32.mxu0 0.0
    %1058 = vmatmul.mubr.f32.gmra.mxu0 %v988
    %v1059 = vpop.f32.mrf.mxu0
    %v1060 = vadd.f32 %v985, %v1059
    %v1061 = vpop.f32.mrf.mxu0
    %1062 = vmatprep.mubr.f32.mxu0 0.0
    %1063 = vmatmul.mubr.f32.gmra.mxu0 %v991
    %v1064 = vpop.f32.mrf.mxu0
    %v1065 = vadd.f32 %v985, %v1064
    %v1066 = vpop.f32.mrf.mxu0
    %1067 = vdwg.mxu0
    %vm1068 = vcmask 64512
    %1069 = vst.msk [vmem:[%s7] sm:$0xff] %vm1068, %v1060
    %1070 = vst.msk [vmem:[%s7 + $0x8] sm:$0xff] %vm1068, %v1065
    // Predicated region
    $region30: #{tpu_custom_call.1} parent=1 // pred_check
      _
    $region31: #{tpu_custom_call.1} parent=1 // pred_check_branch
      %1072 = sbr.rel (0) target = $region33
    $region32: #{tpu_custom_call.1} parent=1 // pred_region
      _
    $region33: #{tpu_custom_call.1} parent=1 // pred_fallthru
      _
    // Predicated region
    $region34: #{tpu_custom_call.1} parent=1 // pred_check
      _
    $region35: #{tpu_custom_call.1} parent=1 // pred_check_branch
      %1074 = sbr.rel (0) target = $region37
    $region36: #{tpu_custom_call.1} parent=1 // pred_region
      %s1076 = ssub.s32 256, 256
      %1077 = vsyncadd [#allocation4], %s1076
      %s1078 = sshll.u32 [#allocation3], 4
      %s1079 = int_to_ptr.vmem [resolvable:$true] %s1078
      %1084 = dma.vmem_to_hbm [thread:$0]  %s1079, 256, %s8, [#allocation4], 128, 128, 8
    $region37: #{tpu_custom_call.1} parent=1 // pred_fallthru
      _
    // Predicated region
    $region38: #{tpu_custom_call.1} parent=1 // pred_check
      _
    $region39: #{tpu_custom_call.1} parent=1 // pred_check_branch
      %1086 = sbr.rel (0) target = $region41
    $region40: #{tpu_custom_call.1} parent=1 // pred_region
      _
    $region41: #{tpu_custom_call.1} parent=1 // pred_fallthru
      _
    // Predicated region
    $region42: #{tpu_custom_call.1} parent=1 // pred_check
      _
    $region43: #{tpu_custom_call.1} parent=1 // pred_check_branch
      %1088 = sbr.rel (0) target = $region45
    $region44: #{tpu_custom_call.1} parent=1 // pred_region
      %1089 = dma.done [#allocation4], 256
    $region45: #{tpu_custom_call.1} parent=1 // pred_fallthru
      _
    %1090 = vsyncpa [#allocation4], 1

</llo_original>
